<compile_context>
chip_gen: v6e
topology: v6e:2x2x1
jax: 0.10.0
libtpu: 0.0.40
codegen_flags: <defaults>
</compile_context>

<pallas_src>
from functools import partial

import jax
import jax.numpy as jnp
from jax import lax
from jax.experimental import pallas as pl
from jax.experimental.pallas import tpu as pltpu

LEAKY_SLOPE = 0.01

# Fits v7x's 64 MiB physical VMEM with headroom; also raises the 16/32 MiB scoped default
# on v5e/v6e so larger tiles can be double-buffered.
_VMEM_LIMIT_BYTES = 48 * 1024 * 1024

_CONV_ROW_BLOCK = 64       # output rows per conv grid step
_GEMM_ROW_BLOCK = 2048     # pixels per fused head/cls grid step
_BILINEAR_ROW_BLOCK = 64   # output rows per bilinear grid step


def _round_up(x, m):
    return ((x + m - 1) // m) * m


def _pick_block(total, max_size, quantum=8):
    """Largest block <= max_size that divides `total` and is a multiple of `quantum`.
    Falls back to the full axis (always a legal block)."""
    if total <= max_size:
        return total
    start = max_size - (max_size % quantum)
    for d in range(start, 0, -quantum):
        if total % d == 0:
            return d
    return total


# ----------------------------- Pallas kernels -------------------------------

def _conv3x3_s2_kernel(x_ref, w_ref, b_ref, o_ref, *, slope):
    """Fused im2col + GEMM + bias + leaky_relu for a stride-2 3x3 conv.

    The stride-2 3x3 conv has been rewritten (in the wrapper) as a stride-1 2x2 conv over
    a space-to-depth input, so the 4 shifted patches below are unit-stride VMEM slices.
      x_ref: (1, TH+1, Wo_p+1, Kp)  bf16 (row-halo window of the s2d input)
      w_ref: (4, Kp, Cout)          bf16 (tap = ry*2+rx)
      b_ref: (1, Cout)              f32
      o_ref: (1, TH, Wo_p, Cout)    f32 (NHWC block)
    """
    th = o_ref.shape[1]
    wo_p = o_ref.shape[2]
    cout = o_ref.shape[3]
    kp = x_ref.shape[3]

    x = x_ref[0].astype(jnp.float32)          # (TH+1, Wo_p+1, Kp)
    w = w_ref[...].astype(jnp.float32)        # (4, Kp, Cout)

    acc = jnp.zeros((th * wo_p, cout), jnp.float32)
    for ry in range(2):
        for rx in range(2):
            patch = x[ry:ry + th, rx:rx + wo_p, :]           # unit-stride slice
            patch = patch.reshape(th * wo_p, kp)             # wo_p is 8-aligned -> clean
            acc = acc + jnp.dot(patch, w[2 * ry + rx],
                                preferred_element_type=jnp.float32)

    acc = acc + b_ref[...]
    if slope is not None:
        acc = jnp.where(acc >= 0, acc, acc * slope)
    o_ref[0] = acc.reshape(th, wo_p, cout).astype(o_ref.dtype)


def _head_cls_kernel(x_ref, w1_ref, b1_ref, w2_ref, b2_ref, o_ref, *, slope):
    """Fused head 1x1 conv (+leaky_relu) and classifier 1x1 conv on one pixel tile.

      x_ref : (TM, C2)    bf16
      w1_ref: (C2, CH)    bf16,  b1_ref: (1, CH)   f32
      w2_ref: (CH, CLSP)  bf16,  b2_ref: (1, CLSP) f32
      o_ref : (TM, CLSP)  f32
    """
    x = x_ref[...]
    h = jnp.dot(x, w1_ref[...], preferred_element_type=jnp.float32)
    h = h + b1_ref[...]
    h = jnp.where(h >= 0, h, h * slope)
    o = jnp.dot(h.astype(w2_ref.dtype), w2_ref[...],
                preferred_element_type=jnp.float32)
    o = o + b2_ref[...]
    o_ref[...] = o.astype(o_ref.dtype)


def _bilinear_kernel(f_ref, a_ref, bt_ref, o_ref):
    """Separable bilinear resize block: out = A_blk @ f @ B^T for one (n,c) plane."""
    f = f_ref[0]                                             # (Hin, Win)
    tmp = jnp.dot(a_ref[...], f, preferred_element_type=jnp.float32)    # (THo, Win)
    o_ref[0] = jnp.dot(tmp, bt_ref[...], preferred_element_type=jnp.float32)


# --------------------------- Pallas call wrappers ----------------------------

def _pack_s2d_weight(w_hwio):
    """(3,3,Cin,Cout) conv weight -> (4, 4*Cin, Cout) stride-1 2x2 weight over the
    space-to-depth input (tap index = ry*2+rx, channel index = u*2C + v*C + ci)."""
    _, _, cin, cout = w_hwio.shape
    w4 = jnp.pad(w_hwio, ((0, 1), (0, 1), (0, 0), (0, 0)))   # taps (3,*),(*,3) are zero
    w4 = w4.reshape(2, 2, 2, 2, cin, cout)                   # (ry, u, rx, v, ci, co)
    w4 = jnp.transpose(w4, (0, 2, 1, 3, 4, 5))               # (ry, rx, u, v, ci, co)
    return w4.reshape(4, 4 * cin, cout)


def _conv3x3_s2(x_nhwc, w_oihw, b, *, slope):
    """3x3 stride-2 pad-1 conv + bias + leaky_relu, NHWC in / NHWC out."""
    N, H, W, Cin = x_nhwc.shape
    Cout = w_oihw.shape[0]
    assert H % 2 == 0 and W % 2 == 0  # TODO(synk): odd spatial sizes

    Ho, Wo = H // 2, W // 2
    Wo_p = _round_up(Wo, 8)            # 8-aligned compute width (tile-aligned reshapes)
    Kp = _round_up(4 * Cin, 8)         # padded GEMM K

    # pad + space-to-depth: stride-2 3x3 conv -> stride-1 2x2 conv with 4*Cin channels
    xp = jnp.pad(x_nhwc, ((0, 0), (1, 1), (1, 1), (0, 0)))               # (N, H+2, W+2, C)
    xs = xp.reshape(N, Ho + 1, 2, Wo + 1, 2, Cin)
    xs = jnp.transpose(xs, (0, 1, 3, 2, 4, 5)).reshape(N, Ho + 1, Wo + 1, 4 * Cin)
    xs = jnp.pad(xs, ((0, 0), (0, 0), (0, (Wo_p + 1) - (Wo + 1)), (0, Kp - 4 * Cin)))

    # row-halo windows (overlap of 1 s2d row per block, ~1/TH duplication), bf16 in HBM
    TH = _pick_block(Ho, _CONV_ROW_BLOCK, quantum=1)
    n_hb = Ho // TH
    row_idx = (jnp.arange(n_hb) * TH)[:, None] + jnp.arange(TH + 1)[None, :]
    win = xs[:, row_idx]                                     # (N, n_hb, TH+1, Wo_p+1, Kp)
    win = win.reshape(N * n_hb, TH + 1, Wo_p + 1, Kp).astype(jnp.bfloat16)

    w_hwio = jnp.transpose(w_oihw, (2, 3, 1, 0))             # (3,3,Cin,Cout)
    w2 = _pack_s2d_weight(w_hwio)                            # (4, 4*Cin, Cout)
    w2 = jnp.pad(w2, ((0, 0), (0, Kp - 4 * Cin), (0, 0))).astype(jnp.bfloat16)
    b2 = b.astype(jnp.float32).reshape(1, Cout)

    NB = N * n_hb
    out = pl.pallas_call(
        partial(_conv3x3_s2_kernel, slope=slope),
        grid=(NB,),
        out_shape=jax.ShapeDtypeStruct((NB, TH, Wo_p, Cout), jnp.float32),
        in_specs=[
            pl.BlockSpec((1, TH + 1, Wo_p + 1, Kp), lambda i: (i, 0, 0, 0)),
            pl.BlockSpec((4, Kp, Cout), lambda i: (0, 0, 0)),
            pl.BlockSpec((1, Cout), lambda i: (0, 0)),
        ],
        out_specs=pl.BlockSpec((1, TH, Wo_p, Cout), lambda i: (i, 0, 0, 0)),
        compiler_params=pltpu.CompilerParams(
            dimension_semantics=("parallel",),
            vmem_limit_bytes=_VMEM_LIMIT_BYTES),
    )(win, w2, b2)

    out = out.reshape(N, n_hb * TH, Wo_p, Cout)[:, :, :Wo, :]
    return out                                               # (N, Ho, Wo, Cout) NHWC


def _head_cls(feat_nhwc, w1_oihw, b1, w2_oihw, b2, *, slope):
    """Fused head 1x1 conv + leaky_relu + classifier 1x1 conv. Returns NCHW class map."""
    N, H, W, C2 = feat_nhwc.shape
    CH = w1_oihw.shape[0]
    NCLS = w2_oihw.shape[0]
    CLSP = _round_up(NCLS, 8)
    M = N * H * W

    x2d = feat_nhwc.reshape(M, C2).astype(jnp.bfloat16)
    w1 = w1_oihw.reshape(CH, C2).T.astype(jnp.bfloat16)              # (C2, CH)
    w2 = jnp.pad(w2_oihw.reshape(NCLS, CH).T,
                 ((0, 0), (0, CLSP - NCLS))).astype(jnp.bfloat16)    # (CH, CLSP)
    b1p = b1.astype(jnp.float32).reshape(1, CH)
    b2p = jnp.pad(b2.astype(jnp.float32), (0, CLSP - NCLS)).reshape(1, CLSP)

    TM = _pick_block(M, _GEMM_ROW_BLOCK, quantum=16)
    out = pl.pallas_call(
        partial(_head_cls_kernel, slope=slope),
        grid=(M // TM,),
        out_shape=jax.ShapeDtypeStruct((M, CLSP), jnp.float32),
        in_specs=[
            pl.BlockSpec((TM, C2), lambda i: (i, 0)),
            pl.BlockSpec((C2, CH), lambda i: (0, 0)),
            pl.BlockSpec((1, CH), lambda i: (0, 0)),
            pl.BlockSpec((CH, CLSP), lambda i: (0, 0)),
            pl.BlockSpec((1, CLSP), lambda i: (0, 0)),
        ],
        out_specs=pl.BlockSpec((TM, CLSP), lambda i: (i, 0)),
        compiler_params=pltpu.CompilerParams(
            dimension_semantics=("parallel",),
            vmem_limit_bytes=_VMEM_LIMIT_BYTES),
    )(x2d, w1, b1p, w2, b2p)

    out = out.reshape(N, H, W, CLSP)[..., :NCLS]
    return jnp.transpose(out, (0, 3, 1, 2))                  # (N, NCLS, H, W)


def _interp_matrix(out_size, in_size):
    """PyTorch bilinear (align_corners=False) interpolation weights as a dense matrix.
    in_size==1 collapses to a copy (i0==i1)."""
    dst = jnp.arange(out_size, dtype=jnp.float32)
    scale = in_size / out_size
    src = (dst + 0.5) * scale - 0.5
    src = jnp.maximum(src, 0.0)
    i0 = jnp.minimum(jnp.floor(src).astype(jnp.int32), in_size - 1)
    i1 = jnp.minimum(i0 + 1, in_size - 1)
    frac = src - i0.astype(jnp.float32)
    oh0 = jax.nn.one_hot(i0, in_size, dtype=jnp.float32)
    oh1 = jax.nn.one_hot(i1, in_size, dtype=jnp.float32)
    return oh0 * (1.0 - frac)[:, None] + oh1 * frac[:, None]


def _bilinear_resize(feat_nchw, out_hw):
    """feat: (N, C, Hin, Win) -> (N, C, Hout, Wout), bilinear, align_corners=False."""
    N, C, Hin, Win = feat_nchw.shape
    Hout, Wout = out_hw
    A = _interp_matrix(Hout, Hin)                            # (Hout, Hin)
    Bt = _interp_matrix(Wout, Win).T                         # (Win, Wout)
    f = feat_nchw.reshape(N * C, Hin, Win).astype(jnp.float32)

    THo = _pick_block(Hout, _BILINEAR_ROW_BLOCK, quantum=8)
    out = pl.pallas_call(
        _bilinear_kernel,
        grid=(N * C, Hout // THo),
        out_shape=jax.ShapeDtypeStruct((N * C, Hout, Wout), jnp.float32),
        in_specs=[
            pl.BlockSpec((1, Hin, Win), lambda b, h: (b, 0, 0)),
            pl.BlockSpec((THo, Hin), lambda b, h: (h, 0)),
            pl.BlockSpec((Win, Wout), lambda b, h: (0, 0)),
        ],
        out_specs=pl.BlockSpec((1, THo, Wout), lambda b, h: (b, h, 0)),
        compiler_params=pltpu.CompilerParams(
            dimension_semantics=("parallel", "parallel"),
            vmem_limit_bytes=_VMEM_LIMIT_BYTES),
    )(f, A, Bt)
    return out.reshape(N, C, Hout, Wout)


# ------------------------------ Model definition ------------------------------

def init_params(key, num_classes, c_in=3, c1=8, c2=16, c_head=32):
    keys = jax.random.split(key, 4)

    def w(k, shape, fan_in):
        return jax.random.normal(k, shape, jnp.float32) * (1.0 / jnp.sqrt(fan_in))

    return {
        # backbone stem (stride-2 3x3 convs, leaky_relu ~ InPlaceABN activation)
        "conv1_w": w(keys[0], (c1, c_in, 3, 3), c_in * 9),
        "conv1_b": jnp.zeros((c1,), jnp.float32),
        "conv2_w": w(keys[1], (c2, c1, 3, 3), c1 * 9),
        "conv2_b": jnp.zeros((c2,), jnp.float32),
        # head 1x1 conv
        "head_w": w(keys[2], (c_head, c2, 1, 1), c2),
        "head_b": jnp.zeros((c_head,), jnp.float32),
        # classifier 1x1 conv (cls = nn.Conv2d(256, num_classes, 1) analogue)
        "cls_w": w(keys[3], (num_classes, c_head, 1, 1), c_head),
        "cls_b": jnp.zeros((num_classes,), jnp.float32),
    }


def simple_segmentation_forward(params, x):
    """Mirrors SimpleSegmentationModel.forward: backbone -> head -> upsample -> tuple."""
    input_shape = x.shape[-2:]
    xh = jnp.transpose(x, (0, 2, 3, 1))                      # NCHW -> NHWC once
    f = _conv3x3_s2(xh, params["conv1_w"], params["conv1_b"], slope=LEAKY_SLOPE)
    f = _conv3x3_s2(f, params["conv2_w"], params["conv2_b"], slope=LEAKY_SLOPE)
    out = _head_cls(f, params["head_w"], params["head_b"],
                    params["cls_w"], params["cls_b"], slope=LEAKY_SLOPE)   # NCHW
    # F.interpolate(out, size=input_shape, mode='bilinear', align_corners=False)
    out = _bilinear_resize(out, input_shape)
    return (out,)


# ------------------------- pure-XLA reference (check) --------------------------

def _reference_forward(params, x):
    def conv(a, w, b, stride, pad, slope):
        y = lax.conv_general_dilated(
            a.astype(jnp.bfloat16), w.astype(jnp.bfloat16),
            window_strides=(stride, stride), padding=[(pad, pad), (pad, pad)],
            dimension_numbers=("NCHW", "OIHW", "NCHW"),
            preferred_element_type=jnp.float32)
        y = y + b.reshape(1, -1, 1, 1)
        if slope is not None:
            y = jnp.where(y >= 0, y, y * slope)
        return y

    f = conv(x, params["conv1_w"], params["conv1_b"], 2, 1, LEAKY_SLOPE)
    f = conv(f, params["conv2_w"], params["conv2_b"], 2, 1, LEAKY_SLOPE)
    h = conv(f, params["head_w"], params["head_b"], 1, 0, LEAKY_SLOPE)
    o = conv(h, params["cls_w"], params["cls_b"], 1, 0, None)
    H, W = x.shape[-2:]
    A = _interp_matrix(H, o.shape[2])
    B = _interp_matrix(W, o.shape[3])
    return jnp.einsum("oh,nchw,pw->ncop", A, o, B)


# ----------------------------------- main -------------------------------------

if __name__ == "__main__":
    key = jax.random.PRNGKey(0)
    k_param, k_x = jax.random.split(key)

    num_classes = 5
    x = jax.random.normal(k_x, (2, 3, 16, 16), jnp.float32)   # NCHW, like PyTorch
    params = init_params(k_param, num_classes)

    fwd = jax.jit(simple_segmentation_forward)
    result = fwd(params, x)
    out = jax.block_until_ready(result[0])

    assert isinstance(result, tuple) and len(result) == 1
    assert out.shape == (2, num_classes, 16, 16), out.shape
    assert out.dtype == jnp.float32

    ref = jax.block_until_ready(jax.jit(_reference_forward)(params, x))
    max_err = float(jnp.max(jnp.abs(out - ref)))
    assert max_err < 2e-2, f"mismatch vs XLA reference: max abs err = {max_err}"

    print("KERNEL_OK")
</pallas_src>

<mosaic_0001>
module attributes {stable_mosaic.version = 11 : i64} {
  func.func @_conv3x3_s2_kernel(%arg0: i32, %arg1: memref<1x9x9x16xbf16, #tpu.memory_space<vmem>>, %arg2: memref<4x16x8xbf16, #tpu.memory_space<vmem>>, %arg3: memref<1x8xf32, #tpu.memory_space<vmem>>, %arg4: memref<1x8x8x8xf32, #tpu.memory_space<vmem>>) attributes {dimension_semantics = [#tpu.dimension_semantics<parallel>], iteration_bounds = array<i64: 2>, scalar_prefetch = 0 : i64, scratch_operands = 0 : i64, tpu.core_type = #tpu.core_type<tc>, window_params = [{transform_indices = @transform_0, window_bounds = array<i64: 1, 9, 9, 16>}, {pipeline_mode = #tpu.pipeline_mode<synchronous>, transform_indices = @transform_1, window_bounds = array<i64: 4, 16, 8>}, {pipeline_mode = #tpu.pipeline_mode<synchronous>, transform_indices = @transform_2, window_bounds = array<i64: 1, 8>}, {transform_indices = @transform_3, window_bounds = array<i64: 1, 8, 8, 8>}]} {
    %c0 = arith.constant 0 : index
    %c0_0 = arith.constant 0 : index
    %c0_1 = arith.constant 0 : index
    %c0_2 = arith.constant 0 : index
    %0 = vector.load %arg1[%c0, %c0_0, %c0_1, %c0_2] : memref<1x9x9x16xbf16, #tpu.memory_space<vmem>>, vector<1x9x9x16xbf16>
    %1 = vector.shape_cast %0 : vector<1x9x9x16xbf16> to vector<9x9x16xbf16>
    %2 = arith.extf %1 : vector<9x9x16xbf16> to vector<9x9x16xf32>
    %c0_3 = arith.constant 0 : index
    %c0_4 = arith.constant 0 : index
    %c0_5 = arith.constant 0 : index
    %3 = vector.load %arg2[%c0_3, %c0_4, %c0_5] : memref<4x16x8xbf16, #tpu.memory_space<vmem>>, vector<4x16x8xbf16>
    %4 = arith.extf %3 : vector<4x16x8xbf16> to vector<4x16x8xf32>
    %cst = arith.constant 0.000000e+00 : f32
    %5 = vector.broadcast %cst : f32 to vector<64x8xf32>
    %6 = vector.extract_strided_slice %2 {offsets = [0, 0, 0], sizes = [8, 8, 16], strides = [1, 1, 1]} : vector<9x9x16xf32> to vector<8x8x16xf32>
    %7 = vector.shape_cast %6 : vector<8x8x16xf32> to vector<64x16xf32>
    %8 = vector.extract_strided_slice %4 {offsets = [0, 0, 0], sizes = [1, 16, 8], strides = [1, 1, 1]} : vector<4x16x8xf32> to vector<1x16x8xf32>
    %9 = vector.shape_cast %8 : vector<1x16x8xf32> to vector<16x8xf32>
    %cst_6 = arith.constant dense<0.000000e+00> : vector<64x8xf32>
    %10 = tpu.matmul %7, %9, %cst_6 {dimension_numbers = #tpu.dot_dimension_numbers<[1], [0], [0], [1], [0, 0, 1, 1], [], []>} : vector<64x16xf32>, vector<16x8xf32>, vector<64x8xf32> -> vector<64x8xf32>
    %11 = arith.addf %5, %10 : vector<64x8xf32>
    %12 = vector.extract_strided_slice %2 {offsets = [0, 1, 0], sizes = [8, 8, 16], strides = [1, 1, 1]} : vector<9x9x16xf32> to vector<8x8x16xf32>
    %13 = vector.shape_cast %12 : vector<8x8x16xf32> to vector<64x16xf32>
    %14 = vector.extract_strided_slice %4 {offsets = [1, 0, 0], sizes = [1, 16, 8], strides = [1, 1, 1]} : vector<4x16x8xf32> to vector<1x16x8xf32>
    %15 = vector.shape_cast %14 : vector<1x16x8xf32> to vector<16x8xf32>
    %cst_7 = arith.constant dense<0.000000e+00> : vector<64x8xf32>
    %16 = tpu.matmul %13, %15, %cst_7 {dimension_numbers = #tpu.dot_dimension_numbers<[1], [0], [0], [1], [0, 0, 1, 1], [], []>} : vector<64x16xf32>, vector<16x8xf32>, vector<64x8xf32> -> vector<64x8xf32>
    %17 = arith.addf %11, %16 : vector<64x8xf32>
    %18 = vector.extract_strided_slice %2 {offsets = [1, 0, 0], sizes = [8, 8, 16], strides = [1, 1, 1]} : vector<9x9x16xf32> to vector<8x8x16xf32>
    %19 = vector.shape_cast %18 : vector<8x8x16xf32> to vector<64x16xf32>
    %20 = vector.extract_strided_slice %4 {offsets = [2, 0, 0], sizes = [1, 16, 8], strides = [1, 1, 1]} : vector<4x16x8xf32> to vector<1x16x8xf32>
    %21 = vector.shape_cast %20 : vector<1x16x8xf32> to vector<16x8xf32>
    %cst_8 = arith.constant dense<0.000000e+00> : vector<64x8xf32>
    %22 = tpu.matmul %19, %21, %cst_8 {dimension_numbers = #tpu.dot_dimension_numbers<[1], [0], [0], [1], [0, 0, 1, 1], [], []>} : vector<64x16xf32>, vector<16x8xf32>, vector<64x8xf32> -> vector<64x8xf32>
    %23 = arith.addf %17, %22 : vector<64x8xf32>
    %24 = vector.extract_strided_slice %2 {offsets = [1, 1, 0], sizes = [8, 8, 16], strides = [1, 1, 1]} : vector<9x9x16xf32> to vector<8x8x16xf32>
    %25 = vector.shape_cast %24 : vector<8x8x16xf32> to vector<64x16xf32>
    %26 = vector.extract_strided_slice %4 {offsets = [3, 0, 0], sizes = [1, 16, 8], strides = [1, 1, 1]} : vector<4x16x8xf32> to vector<1x16x8xf32>
    %27 = vector.shape_cast %26 : vector<1x16x8xf32> to vector<16x8xf32>
    %cst_9 = arith.constant dense<0.000000e+00> : vector<64x8xf32>
    %28 = tpu.matmul %25, %27, %cst_9 {dimension_numbers = #tpu.dot_dimension_numbers<[1], [0], [0], [1], [0, 0, 1, 1], [], []>} : vector<64x16xf32>, vector<16x8xf32>, vector<64x8xf32> -> vector<64x8xf32>
    %29 = arith.addf %23, %28 : vector<64x8xf32>
    %c0_10 = arith.constant 0 : index
    %c0_11 = arith.constant 0 : index
    %30 = vector.load %arg3[%c0_10, %c0_11] : memref<1x8xf32, #tpu.memory_space<vmem>>, vector<1x8xf32>
    %31 = vector.broadcast %30 : vector<1x8xf32> to vector<64x8xf32>
    %32 = arith.addf %29, %31 : vector<64x8xf32>
    %cst_12 = arith.constant 0.000000e+00 : f32
    %33 = vector.broadcast %cst_12 : f32 to vector<64x8xf32>
    %34 = arith.cmpf oge, %32, %33 : vector<64x8xf32>
    %cst_13 = arith.constant 0.00999999977 : f32
    %35 = vector.broadcast %cst_13 : f32 to vector<64x8xf32>
    %36 = arith.mulf %32, %35 : vector<64x8xf32>
    %37 = arith.select %34, %32, %36 : vector<64x8xi1>, vector<64x8xf32>
    %38 = vector.shape_cast %37 : vector<64x8xf32> to vector<8x8x8xf32>
    %c0_14 = arith.constant 0 : index
    %c0_15 = arith.constant 0 : index
    %c0_16 = arith.constant 0 : index
    %c0_17 = arith.constant 0 : index
    %39 = vector.load %arg4[%c0_14, %c0_15, %c0_16, %c0_17] : memref<1x8x8x8xf32, #tpu.memory_space<vmem>>, vector<1x8x8x8xf32>
    %40 = vector.shape_cast %39 : vector<1x8x8x8xf32> to vector<8x8x8xf32>
    %41 = vector.shape_cast %38 : vector<8x8x8xf32> to vector<1x8x8x8xf32>
    tpu.vector_store %arg4[%c0_14, %c0_15, %c0_16, %c0_17], %41 {strides = array<i32>} : memref<1x8x8x8xf32, #tpu.memory_space<vmem>>, vector<1x8x8x8xf32>,
    return
  }
  func.func @transform_0(%arg0: i32) -> (i32, i32, i32, i32) {
    %c0_i32 = arith.constant 0 : i32
    %c0_i32_0 = arith.constant 0 : i32
    %c0_i32_1 = arith.constant 0 : i32
    %c0_i32_2 = arith.constant 0 : i32
    return %arg0, %c0_i32, %c0_i32_0, %c0_i32_1 : i32, i32, i32, i32
  }
  func.func @transform_1(%arg0: i32) -> (i32, i32, i32) {
    %c0_i32 = arith.constant 0 : i32
    %c0_i32_0 = arith.constant 0 : i32
    %c0_i32_1 = arith.constant 0 : i32
    %c0_i32_2 = arith.constant 0 : i32
    return %c0_i32, %c0_i32_0, %c0_i32_1 : i32, i32, i32
  }
  func.func @transform_2(%arg0: i32) -> (i32, i32) {
    %c0_i32 = arith.constant 0 : i32
    %c0_i32_0 = arith.constant 0 : i32
    %c0_i32_1 = arith.constant 0 : i32
    return %c0_i32, %c0_i32_0 : i32, i32
  }
  func.func @transform_3(%arg0: i32) -> (i32, i32, i32, i32) {
    %c0_i32 = arith.constant 0 : i32
    %c0_i32_0 = arith.constant 0 : i32
    %c0_i32_1 = arith.constant 0 : i32
    %c0_i32_2 = arith.constant 0 : i32
    return %arg0, %c0_i32, %c0_i32_0, %c0_i32_1 : i32, i32, i32, i32
  }
}

module attributes {stable_mosaic.version = 11 : i64} {
  func.func @_conv3x3_s2_kernel(%arg0: i32, %arg1: memref<1x5x9x32xbf16, #tpu.memory_space<vmem>>, %arg2: memref<4x32x16xbf16, #tpu.memory_space<vmem>>, %arg3: memref<1x16xf32, #tpu.memory_space<vmem>>, %arg4: memref<1x4x8x16xf32, #tpu.memory_space<vmem>>) attributes {dimension_semantics = [#tpu.dimension_semantics<parallel>], iteration_bounds = array<i64: 2>, scalar_prefetch = 0 : i64, scratch_operands = 0 : i64, tpu.core_type = #tpu.core_type<tc>, window_params = [{transform_indices = @transform_0, window_bounds = array<i64: 1, 5, 9, 32>}, {pipeline_mode = #tpu.pipeline_mode<synchronous>, transform_indices = @transform_1, window_bounds = array<i64: 4, 32, 16>}, {pipeline_mode = #tpu.pipeline_mode<synchronous>, transform_indices = @transform_2, window_bounds = array<i64: 1, 16>}, {transform_indices = @transform_3, window_bounds = array<i64: 1, 4, 8, 16>}]} {
    %c0 = arith.constant 0 : index
    %c0_0 = arith.constant 0 : index
    %c0_1 = arith.constant 0 : index
    %c0_2 = arith.constant 0 : index
    %0 = vector.load %arg1[%c0, %c0_0, %c0_1, %c0_2] : memref<1x5x9x32xbf16, #tpu.memory_space<vmem>>, vector<1x5x9x32xbf16>
    %1 = vector.shape_cast %0 : vector<1x5x9x32xbf16> to vector<5x9x32xbf16>
    %2 = arith.extf %1 : vector<5x9x32xbf16> to vector<5x9x32xf32>
    %c0_3 = arith.constant 0 : index
    %c0_4 = arith.constant 0 : index
    %c0_5 = arith.constant 0 : index
    %3 = vector.load %arg2[%c0_3, %c0_4, %c0_5] : memref<4x32x16xbf16, #tpu.memory_space<vmem>>, vector<4x32x16xbf16>
    %4 = arith.extf %3 : vector<4x32x16xbf16> to vector<4x32x16xf32>
    %cst = arith.constant 0.000000e+00 : f32
    %5 = vector.broadcast %cst : f32 to vector<32x16xf32>
    %6 = vector.extract_strided_slice %2 {offsets = [0, 0, 0], sizes = [4, 8, 32], strides = [1, 1, 1]} : vector<5x9x32xf32> to vector<4x8x32xf32>
    %7 = vector.shape_cast %6 : vector<4x8x32xf32> to vector<32x32xf32>
    %8 = vector.extract_strided_slice %4 {offsets = [0, 0, 0], sizes = [1, 32, 16], strides = [1, 1, 1]} : vector<4x32x16xf32> to vector<1x32x16xf32>
    %9 = vector.shape_cast %8 : vector<1x32x16xf32> to vector<32x16xf32>
    %cst_6 = arith.constant dense<0.000000e+00> : vector<32x16xf32>
    %10 = tpu.matmul %7, %9, %cst_6 {dimension_numbers = #tpu.dot_dimension_numbers<[1], [0], [0], [1], [0, 0, 1, 1], [], []>} : vector<32x32xf32>, vector<32x16xf32>, vector<32x16xf32> -> vector<32x16xf32>
    %11 = arith.addf %5, %10 : vector<32x16xf32>
    %12 = vector.extract_strided_slice %2 {offsets = [0, 1, 0], sizes = [4, 8, 32], strides = [1, 1, 1]} : vector<5x9x32xf32> to vector<4x8x32xf32>
    %13 = vector.shape_cast %12 : vector<4x8x32xf32> to vector<32x32xf32>
    %14 = vector.extract_strided_slice %4 {offsets = [1, 0, 0], sizes = [1, 32, 16], strides = [1, 1, 1]} : vector<4x32x16xf32> to vector<1x32x16xf32>
    %15 = vector.shape_cast %14 : vector<1x32x16xf32> to vector<32x16xf32>
    %cst_7 = arith.constant dense<0.000000e+00> : vector<32x16xf32>
    %16 = tpu.matmul %13, %15, %cst_7 {dimension_numbers = #tpu.dot_dimension_numbers<[1], [0], [0], [1], [0, 0, 1, 1], [], []>} : vector<32x32xf32>, vector<32x16xf32>, vector<32x16xf32> -> vector<32x16xf32>
    %17 = arith.addf %11, %16 : vector<32x16xf32>
    %18 = vector.extract_strided_slice %2 {offsets = [1, 0, 0], sizes = [4, 8, 32], strides = [1, 1, 1]} : vector<5x9x32xf32> to vector<4x8x32xf32>
    %19 = vector.shape_cast %18 : vector<4x8x32xf32> to vector<32x32xf32>
    %20 = vector.extract_strided_slice %4 {offsets = [2, 0, 0], sizes = [1, 32, 16], strides = [1, 1, 1]} : vector<4x32x16xf32> to vector<1x32x16xf32>
    %21 = vector.shape_cast %20 : vector<1x32x16xf32> to vector<32x16xf32>
    %cst_8 = arith.constant dense<0.000000e+00> : vector<32x16xf32>
    %22 = tpu.matmul %19, %21, %cst_8 {dimension_numbers = #tpu.dot_dimension_numbers<[1], [0], [0], [1], [0, 0, 1, 1], [], []>} : vector<32x32xf32>, vector<32x16xf32>, vector<32x16xf32> -> vector<32x16xf32>
    %23 = arith.addf %17, %22 : vector<32x16xf32>
    %24 = vector.extract_strided_slice %2 {offsets = [1, 1, 0], sizes = [4, 8, 32], strides = [1, 1, 1]} : vector<5x9x32xf32> to vector<4x8x32xf32>
    %25 = vector.shape_cast %24 : vector<4x8x32xf32> to vector<32x32xf32>
    %26 = vector.extract_strided_slice %4 {offsets = [3, 0, 0], sizes = [1, 32, 16], strides = [1, 1, 1]} : vector<4x32x16xf32> to vector<1x32x16xf32>
    %27 = vector.shape_cast %26 : vector<1x32x16xf32> to vector<32x16xf32>
    %cst_9 = arith.constant dense<0.000000e+00> : vector<32x16xf32>
    %28 = tpu.matmul %25, %27, %cst_9 {dimension_numbers = #tpu.dot_dimension_numbers<[1], [0], [0], [1], [0, 0, 1, 1], [], []>} : vector<32x32xf32>, vector<32x16xf32>, vector<32x16xf32> -> vector<32x16xf32>
    %29 = arith.addf %23, %28 : vector<32x16xf32>
    %c0_10 = arith.constant 0 : index
    %c0_11 = arith.constant 0 : index
    %30 = vector.load %arg3[%c0_10, %c0_11] : memref<1x16xf32, #tpu.memory_space<vmem>>, vector<1x16xf32>
    %31 = vector.broadcast %30 : vector<1x16xf32> to vector<32x16xf32>
    %32 = arith.addf %29, %31 : vector<32x16xf32>
    %cst_12 = arith.constant 0.000000e+00 : f32
    %33 = vector.broadcast %cst_12 : f32 to vector<32x16xf32>
    %34 = arith.cmpf oge, %32, %33 : vector<32x16xf32>
    %cst_13 = arith.constant 0.00999999977 : f32
    %35 = vector.broadcast %cst_13 : f32 to vector<32x16xf32>
    %36 = arith.mulf %32, %35 : vector<32x16xf32>
    %37 = arith.select %34, %32, %36 : vector<32x16xi1>, vector<32x16xf32>
    %38 = vector.shape_cast %37 : vector<32x16xf32> to vector<4x8x16xf32>
    %c0_14 = arith.constant 0 : index
    %c0_15 = arith.constant 0 : index
    %c0_16 = arith.constant 0 : index
    %c0_17 = arith.constant 0 : index
    %39 = vector.load %arg4[%c0_14, %c0_15, %c0_16, %c0_17] : memref<1x4x8x16xf32, #tpu.memory_space<vmem>>, vector<1x4x8x16xf32>
    %40 = vector.shape_cast %39 : vector<1x4x8x16xf32> to vector<4x8x16xf32>
    %41 = vector.shape_cast %38 : vector<4x8x16xf32> to vector<1x4x8x16xf32>
    tpu.vector_store %arg4[%c0_14, %c0_15, %c0_16, %c0_17], %41 {strides = array<i32>} : memref<1x4x8x16xf32, #tpu.memory_space<vmem>>, vector<1x4x8x16xf32>,
    return
  }
  func.func @transform_0(%arg0: i32) -> (i32, i32, i32, i32) {
    %c0_i32 = arith.constant 0 : i32
    %c0_i32_0 = arith.constant 0 : i32
    %c0_i32_1 = arith.constant 0 : i32
    %c0_i32_2 = arith.constant 0 : i32
    return %arg0, %c0_i32, %c0_i32_0, %c0_i32_1 : i32, i32, i32, i32
  }
  func.func @transform_1(%arg0: i32) -> (i32, i32, i32) {
    %c0_i32 = arith.constant 0 : i32
    %c0_i32_0 = arith.constant 0 : i32
    %c0_i32_1 = arith.constant 0 : i32
    %c0_i32_2 = arith.constant 0 : i32
    return %c0_i32, %c0_i32_0, %c0_i32_1 : i32, i32, i32
  }
  func.func @transform_2(%arg0: i32) -> (i32, i32) {
    %c0_i32 = arith.constant 0 : i32
    %c0_i32_0 = arith.constant 0 : i32
    %c0_i32_1 = arith.constant 0 : i32
    return %c0_i32, %c0_i32_0 : i32, i32
  }
  func.func @transform_3(%arg0: i32) -> (i32, i32, i32, i32) {
    %c0_i32 = arith.constant 0 : i32
    %c0_i32_0 = arith.constant 0 : i32
    %c0_i32_1 = arith.constant 0 : i32
    %c0_i32_2 = arith.constant 0 : i32
    return %arg0, %c0_i32, %c0_i32_0, %c0_i32_1 : i32, i32, i32, i32
  }
}

module attributes {stable_mosaic.version = 11 : i64} {
  func.func @_head_cls_kernel(%arg0: i32, %arg1: memref<32x16xbf16, #tpu.memory_space<vmem>>, %arg2: memref<16x32xbf16, #tpu.memory_space<vmem>>, %arg3: memref<1x32xf32, #tpu.memory_space<vmem>>, %arg4: memref<32x8xbf16, #tpu.memory_space<vmem>>, %arg5: memref<1x8xf32, #tpu.memory_space<vmem>>, %arg6: memref<32x8xf32, #tpu.memory_space<vmem>>) attributes {dimension_semantics = [#tpu.dimension_semantics<parallel>], iteration_bounds = array<i64: 1>, scalar_prefetch = 0 : i64, scratch_operands = 0 : i64, tpu.core_type = #tpu.core_type<tc>, window_params = [{transform_indices = @transform_0, window_bounds = array<i64: 32, 16>}, {pipeline_mode = #tpu.pipeline_mode<synchronous>, transform_indices = @transform_1, window_bounds = array<i64: 16, 32>}, {pipeline_mode = #tpu.pipeline_mode<synchronous>, transform_indices = @transform_2, window_bounds = array<i64: 1, 32>}, {pipeline_mode = #tpu.pipeline_mode<synchronous>, transform_indices = @transform_3, window_bounds = array<i64: 32, 8>}, {pipeline_mode = #tpu.pipeline_mode<synchronous>, transform_indices = @transform_4, window_bounds = array<i64: 1, 8>}, {transform_indices = @transform_5, window_bounds = array<i64: 32, 8>}]} {
    %c0 = arith.constant 0 : index
    %c0_0 = arith.constant 0 : index
    %0 = vector.load %arg1[%c0, %c0_0] : memref<32x16xbf16, #tpu.memory_space<vmem>>, vector<32x16xbf16>
    %c0_1 = arith.constant 0 : index
    %c0_2 = arith.constant 0 : index
    %1 = vector.load %arg2[%c0_1, %c0_2] : memref<16x32xbf16, #tpu.memory_space<vmem>>, vector<16x32xbf16>
    %cst = arith.constant dense<0.000000e+00> : vector<32x32xf32>
    %2 = tpu.matmul %0, %1, %cst {dimension_numbers = #tpu.dot_dimension_numbers<[1], [0], [0], [1], [0, 0, 1, 1], [], []>} : vector<32x16xbf16>, vector<16x32xbf16>, vector<32x32xf32> -> vector<32x32xf32>
    %c0_3 = arith.constant 0 : index
    %c0_4 = arith.constant 0 : index
    %3 = vector.load %arg3[%c0_3, %c0_4] : memref<1x32xf32, #tpu.memory_space<vmem>>, vector<1x32xf32>
    %4 = vector.broadcast %3 : vector<1x32xf32> to vector<32x32xf32>
    %5 = arith.addf %2, %4 : vector<32x32xf32>
    %cst_5 = arith.constant 0.000000e+00 : f32
    %6 = vector.broadcast %cst_5 : f32 to vector<32x32xf32>
    %7 = arith.cmpf oge, %5, %6 : vector<32x32xf32>
    %cst_6 = arith.constant 0.00999999977 : f32
    %8 = vector.broadcast %cst_6 : f32 to vector<32x32xf32>
    %9 = arith.mulf %5, %8 : vector<32x32xf32>
    %10 = arith.select %7, %5, %9 : vector<32x32xi1>, vector<32x32xf32>
    %11 = arith.truncf %10 : vector<32x32xf32> to vector<32x32xbf16>
    %c0_7 = arith.constant 0 : index
    %c0_8 = arith.constant 0 : index
    %12 = vector.load %arg4[%c0_7, %c0_8] : memref<32x8xbf16, #tpu.memory_space<vmem>>, vector<32x8xbf16>
    %cst_9 = arith.constant dense<0.000000e+00> : vector<32x8xf32>
    %13 = tpu.matmul %11, %12, %cst_9 {dimension_numbers = #tpu.dot_dimension_numbers<[1], [0], [0], [1], [0, 0, 1, 1], [], []>} : vector<32x32xbf16>, vector<32x8xbf16>, vector<32x8xf32> -> vector<32x8xf32>
    %c0_10 = arith.constant 0 : index
    %c0_11 = arith.constant 0 : index
    %14 = vector.load %arg5[%c0_10, %c0_11] : memref<1x8xf32, #tpu.memory_space<vmem>>, vector<1x8xf32>
    %15 = vector.broadcast %14 : vector<1x8xf32> to vector<32x8xf32>
    %16 = arith.addf %13, %15 : vector<32x8xf32>
    %c0_12 = arith.constant 0 : index
    %c0_13 = arith.constant 0 : index
    %17 = vector.load %arg6[%c0_12, %c0_13] : memref<32x8xf32, #tpu.memory_space<vmem>>, vector<32x8xf32>
    tpu.vector_store %arg6[%c0_12, %c0_13], %16 {strides = array<i32>} : memref<32x8xf32, #tpu.memory_space<vmem>>, vector<32x8xf32>,
    return
  }
  func.func @transform_0(%arg0: i32) -> (i32, i32) {
    %c0_i32 = arith.constant 0 : i32
    %c0_i32_0 = arith.constant 0 : i32
    return %arg0, %c0_i32 : i32, i32
  }
  func.func @transform_1(%arg0: i32) -> (i32, i32) {
    %c0_i32 = arith.constant 0 : i32
    %c0_i32_0 = arith.constant 0 : i32
    %c0_i32_1 = arith.constant 0 : i32
    return %c0_i32, %c0_i32_0 : i32, i32
  }
  func.func @transform_2(%arg0: i32) -> (i32, i32) {
    %c0_i32 = arith.constant 0 : i32
    %c0_i32_0 = arith.constant 0 : i32
    %c0_i32_1 = arith.constant 0 : i32
    return %c0_i32, %c0_i32_0 : i32, i32
  }
  func.func @transform_3(%arg0: i32) -> (i32, i32) {
    %c0_i32 = arith.constant 0 : i32
    %c0_i32_0 = arith.constant 0 : i32
    %c0_i32_1 = arith.constant 0 : i32
    return %c0_i32, %c0_i32_0 : i32, i32
  }
  func.func @transform_4(%arg0: i32) -> (i32, i32) {
    %c0_i32 = arith.constant 0 : i32
    %c0_i32_0 = arith.constant 0 : i32
    %c0_i32_1 = arith.constant 0 : i32
    return %c0_i32, %c0_i32_0 : i32, i32
  }
  func.func @transform_5(%arg0: i32) -> (i32, i32) {
    %c0_i32 = arith.constant 0 : i32
    %c0_i32_0 = arith.constant 0 : i32
    return %arg0, %c0_i32 : i32, i32
  }
}

module attributes {stable_mosaic.version = 11 : i64} {
  func.func @_bilinear_kernel(%arg0: i32, %arg1: i32, %arg2: memref<1x4x4xf32, #tpu.memory_space<vmem>>, %arg3: memref<16x4xf32, #tpu.memory_space<vmem>>, %arg4: memref<4x16xf32, #tpu.memory_space<vmem>>, %arg5: memref<1x16x16xf32, #tpu.memory_space<vmem>>) attributes {dimension_semantics = [#tpu.dimension_semantics<parallel>, #tpu.dimension_semantics<parallel>], iteration_bounds = array<i64: 10, 1>, scalar_prefetch = 0 : i64, scratch_operands = 0 : i64, tpu.core_type = #tpu.core_type<tc>, window_params = [{transform_indices = @transform_0, window_bounds = array<i64: 1, 4, 4>}, {transform_indices = @transform_1, window_bounds = array<i64: 16, 4>}, {pipeline_mode = #tpu.pipeline_mode<synchronous>, transform_indices = @transform_2, window_bounds = array<i64: 4, 16>}, {transform_indices = @transform_3, window_bounds = array<i64: 1, 16, 16>}]} {
    %c0 = arith.constant 0 : index
    %c0_0 = arith.constant 0 : index
    %c0_1 = arith.constant 0 : index
    %0 = vector.load %arg2[%c0, %c0_0, %c0_1] : memref<1x4x4xf32, #tpu.memory_space<vmem>>, vector<1x4x4xf32>
    %1 = vector.shape_cast %0 : vector<1x4x4xf32> to vector<4x4xf32>
    %c0_2 = arith.constant 0 : index
    %c0_3 = arith.constant 0 : index
    %2 = vector.load %arg3[%c0_2, %c0_3] : memref<16x4xf32, #tpu.memory_space<vmem>>, vector<16x4xf32>
    %cst = arith.constant dense<0.000000e+00> : vector<16x4xf32>
    %3 = tpu.matmul %2, %1, %cst {dimension_numbers = #tpu.dot_dimension_numbers<[1], [0], [0], [1], [0, 0, 1, 1], [], []>} : vector<16x4xf32>, vector<4x4xf32>, vector<16x4xf32> -> vector<16x4xf32>
    %c0_4 = arith.constant 0 : index
    %c0_5 = arith.constant 0 : index
    %4 = vector.load %arg4[%c0_4, %c0_5] : memref<4x16xf32, #tpu.memory_space<vmem>>, vector<4x16xf32>
    %cst_6 = arith.constant dense<0.000000e+00> : vector<16x16xf32>
    %5 = tpu.matmul %3, %4, %cst_6 {dimension_numbers = #tpu.dot_dimension_numbers<[1], [0], [0], [1], [0, 0, 1, 1], [], []>} : vector<16x4xf32>, vector<4x16xf32>, vector<16x16xf32> -> vector<16x16xf32>
    %c0_7 = arith.constant 0 : index
    %c0_8 = arith.constant 0 : index
    %c0_9 = arith.constant 0 : index
    %6 = vector.load %arg5[%c0_7, %c0_8, %c0_9] : memref<1x16x16xf32, #tpu.memory_space<vmem>>, vector<1x16x16xf32>
    %7 = vector.shape_cast %6 : vector<1x16x16xf32> to vector<16x16xf32>
    %8 = vector.shape_cast %5 : vector<16x16xf32> to vector<1x16x16xf32>
    tpu.vector_store %arg5[%c0_7, %c0_8, %c0_9], %8 {strides = array<i32>} : memref<1x16x16xf32, #tpu.memory_space<vmem>>, vector<1x16x16xf32>,
    return
  }
  func.func @transform_0(%arg0: i32, %arg1: i32) -> (i32, i32, i32) {
    %c0_i32 = arith.constant 0 : i32
    %c0_i32_0 = arith.constant 0 : i32
    %c0_i32_1 = arith.constant 0 : i32
    return %arg0, %c0_i32, %c0_i32_0 : i32, i32, i32
  }
  func.func @transform_1(%arg0: i32, %arg1: i32) -> (i32, i32) {
    %c0_i32 = arith.constant 0 : i32
    %c0_i32_0 = arith.constant 0 : i32
    return %arg1, %c0_i32 : i32, i32
  }
  func.func @transform_2(%arg0: i32, %arg1: i32) -> (i32, i32) {
    %c0_i32 = arith.constant 0 : i32
    %c0_i32_0 = arith.constant 0 : i32
    %c0_i32_1 = arith.constant 0 : i32
    return %c0_i32, %c0_i32_0 : i32, i32
  }
  func.func @transform_3(%arg0: i32, %arg1: i32) -> (i32, i32, i32) {
    %c0_i32 = arith.constant 0 : i32
    %c0_i32_0 = arith.constant 0 : i32
    return %arg0, %arg1, %c0_i32 : i32, i32, i32
  }
}

</mosaic_0001>

<llo_original>
// kernel: simple_segmentation_forward.4
$region0: #{simple_segmentation_forward.4}
  #allocation0 [shape = 'u32[]', space=smem, size = 0x4, offset = 0x4, fixed_abs, tag = 'smem constant byte address 0x4 - core index']
  #allocation1 [shape = 'u32[144,128]{1,0:T(1,128)}', space=vmem, size = 0x12000, scoped, tag = 'internal scratch']
  %s0 = inlined_call_operand.vmem [shape: bf16[2,9,9,16], index: 0, kind: input, shape index: {}]
  %s1 = inlined_call_operand.vmem [shape: bf16[4,16,8], index: 1, kind: input, shape index: {}]
  %s2 = inlined_call_operand.vmem [shape: f32[1,8], index: 2, kind: input, shape index: {}]
  %s3 = inlined_call_operand.vmem [shape: f32[2,8,8,8], index: 3, kind: output, shape index: {}]
  %s4 = sld [smem:[#allocation0]]
  $region45: #{simple_segmentation_forward.4} parent=0
    _
  %s6 = ssub.s32 1, %s4
  %s7 = scalar_select 0, %s6, %s4
  loop: start=0, step=1, limit=4
  $region2: #{simple_segmentation_forward.4} parent=0 // loop_pre_header
    _
  $region3: #{simple_segmentation_forward.4} parent=0 // loop_header
    %s9 = sphi 0, %s13
    %p10 = scmp.ge.s32.totalorder %s9, 4
    %s19 = sphi 0, %s21
    %s22 = sphi 0, %s19
    %s23 = sphi 0, %s22
    %s39 = sphi 0, %s23
    %s43 = sphi 0, %s43
    %s45 = sphi 0, %s43
    %s46 = sphi 0, %s45
    %s60 = sphi 0, %s46
    %s64 = sphi 0, %s64
    %s66 = sphi 0, %s64
    %s67 = sphi 0, %s66
    %s81 = sphi 0, %s67
    %s87 = sphi 0, %s89
    %s90 = sphi 0, %s87
    %s91 = sphi 0, %s90
    %s107 = sphi 0, %s91
  $region4: #{simple_segmentation_forward.4} parent=0 // loop_header_branch
    %12 = sbr.rel (%p10) target = $region8
  $region5: #{simple_segmentation_forward.4} parent=0 // loop_body
    %s14 = ssub.s32 %s9, 1
    %s15 = ssub.s32 %s9, 2
    %s16 = sadd.s32 %s9, 1
    %s17 = ssub.s32 %s9, %s16
    %p18 = scmp.eq.s32.totalorder %s17, 0
    %s20 = sadd.s32 %s19, 1
    %s21 = scalar_select %p18, %s19, %s20
    %p24 = pneg %p18
    %p25 = scmp.eq.s32.totalorder %s9, 1
    %p26 = por %p24, %p25
    %p27 = scmp.ne.s32.totalorder %s19, %s22
    %p28 = scmp.eq.s32.totalorder %s9, 0
    %p29 = por %p27, %p28
    %p30 = scmp.ne.s32.totalorder %s19, %s22
    %p31 = scmp.eq.s32.totalorder %s14, 1
    %p32 = por %p30, %p31
    %p33 = scmp.ne.s32.totalorder %s22, %s23
    %p34 = scmp.eq.s32.totalorder %s14, 0
    %p35 = por %p33, %p34
    %p36 = scmp.ne.s32.totalorder %s22, %s23
    %p37 = scmp.eq.s32.totalorder %s15, 1
    %p38 = por %p36, %p37
    %p40 = scmp.ne.s32.totalorder %s23, %s39
    %p41 = scmp.eq.s32.totalorder %s15, 0
    %p42 = por %p40, %p41
    %s44 = sadd.s32 %s43, 1
    %p47 = scmp.eq.s32.totalorder %s9, 1
    %p48 = scmp.ne.s32.totalorder %s43, %s45
    %p49 = scmp.eq.s32.totalorder %s9, 0
    %p50 = por %p48, %p49
    %p51 = scmp.ne.s32.totalorder %s43, %s45
    %p52 = scmp.eq.s32.totalorder %s14, 1
    %p53 = por %p51, %p52
    %p54 = scmp.ne.s32.totalorder %s45, %s46
    %p55 = scmp.eq.s32.totalorder %s14, 0
    %p56 = por %p54, %p55
    %p57 = scmp.ne.s32.totalorder %s45, %s46
    %p58 = scmp.eq.s32.totalorder %s15, 1
    %p59 = por %p57, %p58
    %p61 = scmp.ne.s32.totalorder %s46, %s60
    %p62 = scmp.eq.s32.totalorder %s15, 0
    %p63 = por %p61, %p62
    %s65 = sadd.s32 %s64, 1
    %p68 = scmp.eq.s32.totalorder %s9, 1
    %p69 = scmp.ne.s32.totalorder %s64, %s66
    %p70 = scmp.eq.s32.totalorder %s9, 0
    %p71 = por %p69, %p70
    %p72 = scmp.ne.s32.totalorder %s64, %s66
    %p73 = scmp.eq.s32.totalorder %s14, 1
    %p74 = por %p72, %p73
    %p75 = scmp.ne.s32.totalorder %s66, %s67
    %p76 = scmp.eq.s32.totalorder %s14, 0
    %p77 = por %p75, %p76
    %p78 = scmp.ne.s32.totalorder %s66, %s67
    %p79 = scmp.eq.s32.totalorder %s15, 1
    %p80 = por %p78, %p79
    %p82 = scmp.ne.s32.totalorder %s67, %s81
    %p83 = scmp.eq.s32.totalorder %s15, 0
    %p84 = por %p82, %p83
    %s85 = ssub.s32 %s9, %s16
    %p86 = scmp.eq.s32.totalorder %s85, 0
    %s88 = sadd.s32 %s87, 1
    %s89 = scalar_select %p86, %s87, %s88
    %p92 = pneg %p86
    %p93 = scmp.eq.s32.totalorder %s9, 1
    %p94 = por %p92, %p93
    %p95 = scmp.ne.s32.totalorder %s87, %s90
    %p96 = scmp.eq.s32.totalorder %s9, 0
    %p97 = por %p95, %p96
    %p98 = scmp.ne.s32.totalorder %s87, %s90
    %p99 = scmp.eq.s32.totalorder %s14, 1
    %p100 = por %p98, %p99
    %p101 = scmp.ne.s32.totalorder %s90, %s91
    %p102 = scmp.eq.s32.totalorder %s14, 0
    %p103 = por %p101, %p102
    %p104 = scmp.ne.s32.totalorder %s90, %s91
    %p105 = scmp.eq.s32.totalorder %s15, 1
    %p106 = por %p104, %p105
    %p108 = scmp.ne.s32.totalorder %s91, %s107
    %p109 = scmp.eq.s32.totalorder %s15, 0
    %p110 = por %p108, %p109
    %p111 = scmp.le.s32.totalorder 1, %s9
    %p112 = scmp.lt.s32.totalorder %s9, 3
    %p113 = pnand %p111, %p112
    %p114 = pneg %p113
    // Predicated region
    $region9: #{simple_segmentation_forward.4} parent=5 // pred_check
      _
    $region10: #{simple_segmentation_forward.4} parent=5 // pred_check_branch
      %116 = sbr.rel (%p113) target = $region12
    $region11: #{simple_segmentation_forward.4} parent=5 // pred_region
      %s117 = ssub.s32 %s9, 1
      // Predicated region
      $region13: #{simple_segmentation_forward.4} parent=11 // pred_check
        %p118 = pneg %p56
      $region14: #{simple_segmentation_forward.4} parent=11 // pred_check_branch
        %120 = sbr.rel (%p118) target = $region16
      $region15: #{simple_segmentation_forward.4} parent=11 // pred_region
        _
      $region16: #{simple_segmentation_forward.4} parent=11 // pred_fallthru
        _
      // Predicated region
      $region17: #{simple_segmentation_forward.4} parent=11 // pred_check
        %p121 = pneg %p77
      $region18: #{simple_segmentation_forward.4} parent=11 // pred_check_branch
        %123 = sbr.rel (%p121) target = $region20
      $region19: #{simple_segmentation_forward.4} parent=11 // pred_region
        _
      $region20: #{simple_segmentation_forward.4} parent=11 // pred_fallthru
        _
    $region12: #{simple_segmentation_forward.4} parent=5 // pred_fallthru
      _
    %p124 = scmp.lt.s32.totalorder %s9, 2
    // Predicated region
    $region21: #{simple_segmentation_forward.4} parent=5 // pred_check
      %p125 = pneg %p124
    $region22: #{simple_segmentation_forward.4} parent=5 // pred_check_branch
      %127 = sbr.rel (%p125) target = $region24
    $region23: #{simple_segmentation_forward.4} parent=5 // pred_region
      // Predicated region
      $region25: #{simple_segmentation_forward.4} parent=23 // pred_check
        %p128 = pneg %p29
      $region26: #{simple_segmentation_forward.4} parent=23 // pred_check_branch
        %130 = sbr.rel (%p128) target = $region28
      $region27: #{simple_segmentation_forward.4} parent=23 // pred_region
        %p131 = scmp.lt.s32.totalorder %s9, 1
        %s132 = scalar_select %p131, %s9, 1
        %s133 = smul.addr %s132, 18
        %s134 = smul.addr %s133, 4
        %s135 = scalar_lea.vmem %s0, %s134
      $region28: #{simple_segmentation_forward.4} parent=23 // pred_fallthru
        _
    $region24: #{simple_segmentation_forward.4} parent=5 // pred_fallthru
      _
    %p136 = scmp.le.s32.totalorder 1, %s9
    %p137 = scmp.lt.s32.totalorder %s9, 3
    %p138 = pnand %p136, %p137
    %p139 = pneg %p138
    // Predicated region
    $region29: #{simple_segmentation_forward.4} parent=5 // pred_check
      _
    $region30: #{simple_segmentation_forward.4} parent=5 // pred_check_branch
      %141 = sbr.rel (%p138) target = $region32
    $region31: #{simple_segmentation_forward.4} parent=5 // pred_region
      %s142 = ssub.s32 %s9, 1
      %p143 = scmp.lt.s32.totalorder %s14, 1
      %s144 = scalar_select %p143, %s14, 1
      %s145 = smul.addr %s144, 18
      %s146 = smul.addr %s145, 4
      %s147 = scalar_lea.vmem %s0, %s146
      %p148 = pneg %p35
      %p149 = pneg %p32
      %p150 = pneg %p56
      %p151 = pneg %p53
      %p152 = pneg %p77
      %p153 = pneg %p74
      %p154 = pneg %p103
      %p155 = pneg %p100
      %p156 = scmp.lt.s32.totalorder %s14, 1
      %s157 = scalar_select %p156, %s14, 1
      %s158 = smul.addr %s157, 8
      %s159 = smul.addr %s158, 8
      %s160 = scalar_lea.vmem %s3, %s159
      %p161 = scmp.lt.s32.totalorder %s14, 1
      %s162 = scalar_select %p161, %s14, 1
      %s163 = smul.addr %s162, 18
      %s164 = smul.addr %s163, 4
      %s165 = scalar_lea.vmem %s0, %s164
      %p166 = scmp.lt.s32.totalorder %s14, 1
      %s167 = scalar_select %p166, %s14, 1
      %s168 = smul.addr %s167, 8
      %s169 = smul.addr %s168, 8
      %s170 = scalar_lea.vmem %s3, %s169
      %v171 = vld [vmem:[%s165] sm:$0xf]
      %v172 = vld [vmem:[%s165 + $0x4] sm:$0x1]
      %v173 = vld [vmem:[%s165 + $0x8] sm:$0xf]
      %v174 = vld [vmem:[%s165 + $0xc] sm:$0x1]
      %v175 = vld [vmem:[%s165 + $0x10] sm:$0xf]
      %v176 = vld [vmem:[%s165 + $0x14] sm:$0x1]
      %v177 = vld [vmem:[%s165 + $0x18] sm:$0xf]
      %v178 = vld [vmem:[%s165 + $0x1c] sm:$0x1]
      %v179 = vld [vmem:[%s165 + $0x20] sm:$0xf]
      %v180 = vld [vmem:[%s165 + $0x24] sm:$0x1]
      %v181 = vld [vmem:[%s165 + $0x28] sm:$0xf]
      %v182 = vld [vmem:[%s165 + $0x2c] sm:$0x1]
      %v183 = vld [vmem:[%s165 + $0x30] sm:$0xf]
      %v184 = vld [vmem:[%s165 + $0x34] sm:$0x1]
      %v185 = vld [vmem:[%s165 + $0x38] sm:$0xf]
      %v186 = vld [vmem:[%s165 + $0x3c] sm:$0x1]
      %v187 = vld [vmem:[%s165 + $0x40] sm:$0xf]
      %v188 = vld [vmem:[%s165 + $0x44] sm:$0x1]
      %v189 = vunpack.c.l.bf16 %v171
      %v190 = vunpack.c.l.bf16 %v172
      %v191 = vunpack.c.l.bf16 %v173
      %v192 = vunpack.c.l.bf16 %v174
      %v193 = vunpack.c.l.bf16 %v175
      %v194 = vunpack.c.l.bf16 %v176
      %v195 = vunpack.c.l.bf16 %v177
      %v196 = vunpack.c.l.bf16 %v178
      %v197 = vunpack.c.l.bf16 %v179
      %v198 = vunpack.c.l.bf16 %v180
      %v199 = vunpack.c.l.bf16 %v181
      %v200 = vunpack.c.l.bf16 %v182
      %v201 = vunpack.c.l.bf16 %v183
      %v202 = vunpack.c.l.bf16 %v184
      %v203 = vunpack.c.l.bf16 %v185
      %v204 = vunpack.c.l.bf16 %v186
      %v205 = vunpack.c.l.bf16 %v187
      %v206 = vunpack.c.l.bf16 %v188
      %v207 = vld [vmem:[%s1] sm:$0xf]
      %v208 = vld [vmem:[%s1 + $0x4] sm:$0xf]
      %v209 = vld [vmem:[%s1 + $0x8] sm:$0xf]
      %v210 = vld [vmem:[%s1 + $0xc] sm:$0xf]
      %v211 = vld [vmem:[%s1 + $0x10] sm:$0xf]
      %v212 = vld [vmem:[%s1 + $0x14] sm:$0xf]
      %v213 = vld [vmem:[%s1 + $0x18] sm:$0xf]
      %v214 = vld [vmem:[%s1 + $0x1c] sm:$0xf]
      %v215 = vunpack.c.l.bf16 %v207
      %v216 = vunpack.c.l.bf16 %v208
      %v217 = vunpack.c.l.bf16 %v209
      %v218 = vunpack.c.l.bf16 %v210
      %v219 = vunpack.c.l.bf16 %v211
      %v220 = vunpack.c.l.bf16 %v212
      %v221 = vunpack.c.l.bf16 %v213
      %v222 = vunpack.c.l.bf16 %v214
      %vm239 = vcmask 1046528
      %v240 = vrot.slane %v189, 1
      %v241 = vrot.slane %v190, 1
      %v242 = vsel %vm239, %v240, %v241
      %v243 = vrot.slane %v191, 1
      %v244 = vrot.slane %v192, 1
      %v245 = vsel %vm239, %v243, %v244
      %v246 = vrot.slane %v193, 1
      %v247 = vrot.slane %v194, 1
      %v248 = vsel %vm239, %v246, %v247
      %v249 = vrot.slane %v195, 1
      %v250 = vrot.slane %v196, 1
      %v251 = vsel %vm239, %v249, %v250
      %v252 = vrot.slane %v197, 1
      %v253 = vrot.slane %v198, 1
      %v254 = vsel %vm239, %v252, %v253
      %v255 = vrot.slane %v199, 1
      %v256 = vrot.slane %v200, 1
      %v257 = vsel %vm239, %v255, %v256
      %v258 = vrot.slane %v201, 1
      %v259 = vrot.slane %v202, 1
      %v260 = vsel %vm239, %v258, %v259
      %v261 = vrot.slane %v203, 1
      %v262 = vrot.slane %v204, 1
      %v263 = vsel %vm239, %v261, %v262
      %vm264 = vcmask 130048
      %v265 = vsel %vm264, %v242, 0
      %v267 = vsel %vm264, %v245, 0
      %v269 = vsel %vm264, %v248, 0
      %v271 = vsel %vm264, %v251, 0
      %v273 = vsel %vm264, %v254, 0
      %v275 = vsel %vm264, %v257, 0
      %v277 = vsel %vm264, %v260, 0
      %v279 = vsel %vm264, %v263, 0
      %281 = vmatprep.subr.mxu0 0.0
      %282 = vmatpush1.msra.mxu0 0.0
      %283 = vmatprep.subr.mxu0 0.0
      %284 = vmatpush1.msra.mxu0 0.0
      %285 = vmatprep.subr.mxu0 0.0
      %286 = vmatpush1.msra.mxu0 0.0
      %287 = vmatprep.subr.mxu0 0.0
      %288 = vmatpush1.msra.mxu0 0.0
      %289 = vmatprep.subr.mxu0 0.0
      %290 = vmatpush1.msra.mxu0 0.0
      %291 = vmatprep.subr.mxu0 0.0
      %292 = vmatpush1.msra.mxu0 0.0
      %293 = vmatprep.subr.mxu0 0.0
      %294 = vmatpush1.msra.mxu0 0.0
      %295 = vmatprep.subr.mxu0 0.0
      %296 = vmatpush1.msra.mxu0 0.0
      %297 = vmatprep.subr.mxu0 0.0
      %298 = vmatpush1.msra.mxu0 0.0
      %299 = vmatprep.subr.mxu0 0.0
      %300 = vmatpush1.msra.mxu0 0.0
      %301 = vmatprep.subr.mxu0 0.0
      %302 = vmatpush1.msra.mxu0 0.0
      %303 = vmatprep.subr.mxu0 0.0
      %304 = vmatpush1.msra.mxu0 0.0
      %305 = vmatprep.subr.mxu0 0.0
      %306 = vmatpush1.msra.mxu0 0.0
      %307 = vmatprep.subr.mxu0 0.0
      %308 = vmatpush1.msra.mxu0 0.0
      %309 = vmatprep.subr.mxu0 0.0
      %310 = vmatpush1.msra.mxu0 %v218
      %311 = vmatprep.subr.mxu0 0.0
      %312 = vmatpush1.msra.mxu0 %v217
      %313 = vmatprep.subr.mxu0 0.0
      %314 = vmatpush2.msra.mxu0 0.0
      %315 = vmatprep.subr.mxu0 0.0
      %316 = vmatpush2.msra.mxu0 0.0
      %317 = vmatprep.subr.mxu0 0.0
      %318 = vmatpush2.msra.mxu0 0.0
      %319 = vmatprep.subr.mxu0 0.0
      %320 = vmatpush2.msra.mxu0 0.0
      %321 = vmatprep.subr.mxu0 0.0
      %322 = vmatpush2.msra.mxu0 0.0
      %323 = vmatprep.subr.mxu0 0.0
      %324 = vmatpush2.msra.mxu0 0.0
      %325 = vmatprep.subr.mxu0 0.0
      %326 = vmatpush2.msra.mxu0 0.0
      %327 = vmatprep.subr.mxu0 0.0
      %328 = vmatpush2.msra.mxu0 0.0
      %329 = vmatprep.subr.mxu0 0.0
      %330 = vmatpush2.msra.mxu0 0.0
      %331 = vmatprep.subr.mxu0 0.0
      %332 = vmatpush2.msra.mxu0 0.0
      %333 = vmatprep.subr.mxu0 0.0
      %334 = vmatpush2.msra.mxu0 0.0
      %335 = vmatprep.subr.mxu0 0.0
      %336 = vmatpush2.msra.mxu0 0.0
      %337 = vmatprep.subr.mxu0 0.0
      %338 = vmatpush2.msra.mxu0 0.0
      %339 = vmatprep.subr.mxu0 0.0
      %340 = vmatpush2.msra.mxu0 0.0
      %341 = vmatprep.subr.mxu0 0.0
      %342 = vmatpush2.msra.mxu0 0.0
      %343 = vmatprep.subr.mxu0 0.0
      %344 = vmatpush2.msra.mxu0 0.0
      %345 = vmatprep.mubr.f32.mxu0 0.0
      %346 = vmatmul.mubr.f32.gmra.mxu0 %v265
      %v347 = vpop.f32.mrf.mxu0
      %v348 = vadd.f32 0.0, %v347
      %v349 = vpop.f32.mrf.mxu0
      %350 = vmatprep.mubr.f32.mxu0 0.0
      %351 = vmatmul.mubr.f32.gmra.mxu0 %v267
      %v352 = vpop.f32.mrf.mxu0
      %v353 = vadd.f32 0.0, %v352
      %v354 = vpop.f32.mrf.mxu0
      %355 = vmatprep.mubr.f32.mxu0 0.0
      %356 = vmatmul.mubr.f32.gmra.mxu0 %v269
      %v357 = vpop.f32.mrf.mxu0
      %v358 = vadd.f32 0.0, %v357
      %v359 = vpop.f32.mrf.mxu0
      %360 = vmatprep.mubr.f32.mxu0 0.0
      %361 = vmatmul.mubr.f32.gmra.mxu0 %v271
      %v362 = vpop.f32.mrf.mxu0
      %v363 = vadd.f32 0.0, %v362
      %v364 = vpop.f32.mrf.mxu0
      %365 = vmatprep.mubr.f32.mxu0 0.0
      %366 = vmatmul.mubr.f32.gmra.mxu0 %v273
      %v367 = vpop.f32.mrf.mxu0
      %v368 = vadd.f32 0.0, %v367
      %v369 = vpop.f32.mrf.mxu0
      %370 = vmatprep.mubr.f32.mxu0 0.0
      %371 = vmatmul.mubr.f32.gmra.mxu0 %v275
      %v372 = vpop.f32.mrf.mxu0
      %v373 = vadd.f32 0.0, %v372
      %v374 = vpop.f32.mrf.mxu0
      %375 = vmatprep.mubr.f32.mxu0 0.0
      %376 = vmatmul.mubr.f32.gmra.mxu0 %v277
      %v377 = vpop.f32.mrf.mxu0
      %v378 = vadd.f32 0.0, %v377
      %v379 = vpop.f32.mrf.mxu0
      %380 = vmatprep.mubr.f32.mxu0 0.0
      %381 = vmatmul.mubr.f32.gmra.mxu0 %v279
      %v382 = vpop.f32.mrf.mxu0
      %v383 = vadd.f32 0.0, %v382
      %v384 = vpop.f32.mrf.mxu0
      %385 = vdwg.mxu0
      %v386 = vsel %vm264, %v189, 0
      %v388 = vsel %vm264, %v191, 0
      %v390 = vsel %vm264, %v193, 0
      %v392 = vsel %vm264, %v195, 0
      %v394 = vsel %vm264, %v197, 0
      %v396 = vsel %vm264, %v199, 0
      %v398 = vsel %vm264, %v201, 0
      %v400 = vsel %vm264, %v203, 0
      %402 = vmatprep.subr.mxu0 0.0
      %403 = vmatpush1.msra.mxu0 0.0
      %404 = vmatprep.subr.mxu0 0.0
      %405 = vmatpush1.msra.mxu0 0.0
      %406 = vmatprep.subr.mxu0 0.0
      %407 = vmatpush1.msra.mxu0 0.0
      %408 = vmatprep.subr.mxu0 0.0
      %409 = vmatpush1.msra.mxu0 0.0
      %410 = vmatprep.subr.mxu0 0.0
      %411 = vmatpush1.msra.mxu0 0.0
      %412 = vmatprep.subr.mxu0 0.0
      %413 = vmatpush1.msra.mxu0 0.0
      %414 = vmatprep.subr.mxu0 0.0
      %415 = vmatpush1.msra.mxu0 0.0
      %416 = vmatprep.subr.mxu0 0.0
      %417 = vmatpush1.msra.mxu0 0.0
      %418 = vmatprep.subr.mxu0 0.0
      %419 = vmatpush1.msra.mxu0 0.0
      %420 = vmatprep.subr.mxu0 0.0
      %421 = vmatpush1.msra.mxu0 0.0
      %422 = vmatprep.subr.mxu0 0.0
      %423 = vmatpush1.msra.mxu0 0.0
      %424 = vmatprep.subr.mxu0 0.0
      %425 = vmatpush1.msra.mxu0 0.0
      %426 = vmatprep.subr.mxu0 0.0
      %427 = vmatpush1.msra.mxu0 0.0
      %428 = vmatprep.subr.mxu0 0.0
      %429 = vmatpush1.msra.mxu0 0.0
      %430 = vmatprep.subr.mxu0 0.0
      %431 = vmatpush1.msra.mxu0 %v216
      %432 = vmatprep.subr.mxu0 0.0
      %433 = vmatpush1.msra.mxu0 %v215
      %434 = vmatprep.subr.mxu0 0.0
      %435 = vmatpush2.msra.mxu0 0.0
      %436 = vmatprep.subr.mxu0 0.0
      %437 = vmatpush2.msra.mxu0 0.0
      %438 = vmatprep.subr.mxu0 0.0
      %439 = vmatpush2.msra.mxu0 0.0
      %440 = vmatprep.subr.mxu0 0.0
      %441 = vmatpush2.msra.mxu0 0.0
      %442 = vmatprep.subr.mxu0 0.0
      %443 = vmatpush2.msra.mxu0 0.0
      %444 = vmatprep.subr.mxu0 0.0
      %445 = vmatpush2.msra.mxu0 0.0
      %446 = vmatprep.subr.mxu0 0.0
      %447 = vmatpush2.msra.mxu0 0.0
      %448 = vmatprep.subr.mxu0 0.0
      %449 = vmatpush2.msra.mxu0 0.0
      %450 = vmatprep.subr.mxu0 0.0
      %451 = vmatpush2.msra.mxu0 0.0
      %452 = vmatprep.subr.mxu0 0.0
      %453 = vmatpush2.msra.mxu0 0.0
      %454 = vmatprep.subr.mxu0 0.0
      %455 = vmatpush2.msra.mxu0 0.0
      %456 = vmatprep.subr.mxu0 0.0
      %457 = vmatpush2.msra.mxu0 0.0
      %458 = vmatprep.subr.mxu0 0.0
      %459 = vmatpush2.msra.mxu0 0.0
      %460 = vmatprep.subr.mxu0 0.0
      %461 = vmatpush2.msra.mxu0 0.0
      %462 = vmatprep.subr.mxu0 0.0
      %463 = vmatpush2.msra.mxu0 0.0
      %464 = vmatprep.subr.mxu0 0.0
      %465 = vmatpush2.msra.mxu0 0.0
      %466 = vmatprep.mubr.f32.mxu0 0.0
      %467 = vmatmul.mubr.f32.gmra.mxu0 %v386
      %v468 = vpop.f32.mrf.mxu0
      %v469 = vadd.f32 %v348, %v468
      %v470 = vpop.f32.mrf.mxu0
      %471 = vmatprep.mubr.f32.mxu0 0.0
      %472 = vmatmul.mubr.f32.gmra.mxu0 %v388
      %v473 = vpop.f32.mrf.mxu0
      %v474 = vadd.f32 %v353, %v473
      %v475 = vpop.f32.mrf.mxu0
      %476 = vmatprep.mubr.f32.mxu0 0.0
      %477 = vmatmul.mubr.f32.gmra.mxu0 %v390
      %v478 = vpop.f32.mrf.mxu0
      %v479 = vadd.f32 %v358, %v478
      %v480 = vpop.f32.mrf.mxu0
      %481 = vmatprep.mubr.f32.mxu0 0.0
      %482 = vmatmul.mubr.f32.gmra.mxu0 %v392
      %v483 = vpop.f32.mrf.mxu0
      %v484 = vadd.f32 %v363, %v483
      %v485 = vpop.f32.mrf.mxu0
      %486 = vmatprep.mubr.f32.mxu0 0.0
      %487 = vmatmul.mubr.f32.gmra.mxu0 %v394
      %v488 = vpop.f32.mrf.mxu0
      %v489 = vadd.f32 %v368, %v488
      %v490 = vpop.f32.mrf.mxu0
      %491 = vmatprep.mubr.f32.mxu0 0.0
      %492 = vmatmul.mubr.f32.gmra.mxu0 %v396
      %v493 = vpop.f32.mrf.mxu0
      %v494 = vadd.f32 %v373, %v493
      %v495 = vpop.f32.mrf.mxu0
      %496 = vmatprep.mubr.f32.mxu0 0.0
      %497 = vmatmul.mubr.f32.gmra.mxu0 %v398
      %v498 = vpop.f32.mrf.mxu0
      %v499 = vadd.f32 %v378, %v498
      %v500 = vpop.f32.mrf.mxu0
      %501 = vmatprep.mubr.f32.mxu0 0.0
      %502 = vmatmul.mubr.f32.gmra.mxu0 %v400
      %v503 = vpop.f32.mrf.mxu0
      %v504 = vadd.f32 %v383, %v503
      %v505 = vpop.f32.mrf.mxu0
      %506 = vdwg.mxu0
      %v508 = vsel %vm264, %v205, 0
      %510 = vmatprep.subr.mxu0 0.0
      %511 = vmatpush1.msra.mxu0 0.0
      %512 = vmatprep.subr.mxu0 0.0
      %513 = vmatpush1.msra.mxu0 0.0
      %514 = vmatprep.subr.mxu0 0.0
      %515 = vmatpush1.msra.mxu0 0.0
      %516 = vmatprep.subr.mxu0 0.0
      %517 = vmatpush1.msra.mxu0 0.0
      %518 = vmatprep.subr.mxu0 0.0
      %519 = vmatpush1.msra.mxu0 0.0
      %520 = vmatprep.subr.mxu0 0.0
      %521 = vmatpush1.msra.mxu0 0.0
      %522 = vmatprep.subr.mxu0 0.0
      %523 = vmatpush1.msra.mxu0 0.0
      %524 = vmatprep.subr.mxu0 0.0
      %525 = vmatpush1.msra.mxu0 0.0
      %526 = vmatprep.subr.mxu0 0.0
      %527 = vmatpush1.msra.mxu0 0.0
      %528 = vmatprep.subr.mxu0 0.0
      %529 = vmatpush1.msra.mxu0 0.0
      %530 = vmatprep.subr.mxu0 0.0
      %531 = vmatpush1.msra.mxu0 0.0
      %532 = vmatprep.subr.mxu0 0.0
      %533 = vmatpush1.msra.mxu0 0.0
      %534 = vmatprep.subr.mxu0 0.0
      %535 = vmatpush1.msra.mxu0 0.0
      %536 = vmatprep.subr.mxu0 0.0
      %537 = vmatpush1.msra.mxu0 0.0
      %538 = vmatprep.subr.mxu0 0.0
      %539 = vmatpush1.msra.mxu0 %v220
      %540 = vmatprep.subr.mxu0 0.0
      %541 = vmatpush1.msra.mxu0 %v219
      %542 = vmatprep.subr.mxu0 0.0
      %543 = vmatpush2.msra.mxu0 0.0
      %544 = vmatprep.subr.mxu0 0.0
      %545 = vmatpush2.msra.mxu0 0.0
      %546 = vmatprep.subr.mxu0 0.0
      %547 = vmatpush2.msra.mxu0 0.0
      %548 = vmatprep.subr.mxu0 0.0
      %549 = vmatpush2.msra.mxu0 0.0
      %550 = vmatprep.subr.mxu0 0.0
      %551 = vmatpush2.msra.mxu0 0.0
      %552 = vmatprep.subr.mxu0 0.0
      %553 = vmatpush2.msra.mxu0 0.0
      %554 = vmatprep.subr.mxu0 0.0
      %555 = vmatpush2.msra.mxu0 0.0
      %556 = vmatprep.subr.mxu0 0.0
      %557 = vmatpush2.msra.mxu0 0.0
      %558 = vmatprep.subr.mxu0 0.0
      %559 = vmatpush2.msra.mxu0 0.0
      %560 = vmatprep.subr.mxu0 0.0
      %561 = vmatpush2.msra.mxu0 0.0
      %562 = vmatprep.subr.mxu0 0.0
      %563 = vmatpush2.msra.mxu0 0.0
      %564 = vmatprep.subr.mxu0 0.0
      %565 = vmatpush2.msra.mxu0 0.0
      %566 = vmatprep.subr.mxu0 0.0
      %567 = vmatpush2.msra.mxu0 0.0
      %568 = vmatprep.subr.mxu0 0.0
      %569 = vmatpush2.msra.mxu0 0.0
      %570 = vmatprep.subr.mxu0 0.0
      %571 = vmatpush2.msra.mxu0 0.0
      %572 = vmatprep.subr.mxu0 0.0
      %573 = vmatpush2.msra.mxu0 0.0
      %574 = vmatprep.mubr.f32.mxu0 0.0
      %575 = vmatmul.mubr.f32.gmra.mxu0 %v388
      %v576 = vpop.f32.mrf.mxu0
      %v577 = vadd.f32 0.0, %v576
      %v578 = vpop.f32.mrf.mxu0
      %579 = vmatprep.mubr.f32.mxu0 0.0
      %580 = vmatmul.mubr.f32.gmra.mxu0 %v390
      %v581 = vpop.f32.mrf.mxu0
      %v582 = vadd.f32 0.0, %v581
      %v583 = vpop.f32.mrf.mxu0
      %584 = vmatprep.mubr.f32.mxu0 0.0
      %585 = vmatmul.mubr.f32.gmra.mxu0 %v392
      %v586 = vpop.f32.mrf.mxu0
      %v587 = vadd.f32 0.0, %v586
      %v588 = vpop.f32.mrf.mxu0
      %589 = vmatprep.mubr.f32.mxu0 0.0
      %590 = vmatmul.mubr.f32.gmra.mxu0 %v394
      %v591 = vpop.f32.mrf.mxu0
      %v592 = vadd.f32 0.0, %v591
      %v593 = vpop.f32.mrf.mxu0
      %594 = vmatprep.mubr.f32.mxu0 0.0
      %595 = vmatmul.mubr.f32.gmra.mxu0 %v396
      %v596 = vpop.f32.mrf.mxu0
      %v597 = vadd.f32 0.0, %v596
      %v598 = vpop.f32.mrf.mxu0
      %599 = vmatprep.mubr.f32.mxu0 0.0
      %600 = vmatmul.mubr.f32.gmra.mxu0 %v398
      %v601 = vpop.f32.mrf.mxu0
      %v602 = vadd.f32 0.0, %v601
      %v603 = vpop.f32.mrf.mxu0
      %604 = vmatprep.mubr.f32.mxu0 0.0
      %605 = vmatmul.mubr.f32.gmra.mxu0 %v400
      %v606 = vpop.f32.mrf.mxu0
      %v607 = vadd.f32 0.0, %v606
      %v608 = vpop.f32.mrf.mxu0
      %609 = vmatprep.mubr.f32.mxu0 0.0
      %610 = vmatmul.mubr.f32.gmra.mxu0 %v508
      %v611 = vpop.f32.mrf.mxu0
      %v612 = vadd.f32 0.0, %v611
      %v613 = vpop.f32.mrf.mxu0
      %614 = vdwg.mxu0
      %v615 = vadd.f32 %v469, %v577
      %v616 = vadd.f32 %v474, %v582
      %v617 = vadd.f32 %v479, %v587
      %v618 = vadd.f32 %v484, %v592
      %v619 = vadd.f32 %v489, %v597
      %v620 = vadd.f32 %v494, %v602
      %v621 = vadd.f32 %v499, %v607
      %v622 = vadd.f32 %v504, %v612
      %v624 = vrot.slane %v205, 1
      %v625 = vrot.slane %v206, 1
      %v626 = vsel %vm239, %v624, %v625
      %v627 = vsel %vm264, %v626, 0
      %629 = vmatprep.subr.mxu0 0.0
      %630 = vmatpush1.msra.mxu0 0.0
      %631 = vmatprep.subr.mxu0 0.0
      %632 = vmatpush1.msra.mxu0 0.0
      %633 = vmatprep.subr.mxu0 0.0
      %634 = vmatpush1.msra.mxu0 0.0
      %635 = vmatprep.subr.mxu0 0.0
      %636 = vmatpush1.msra.mxu0 0.0
      %637 = vmatprep.subr.mxu0 0.0
      %638 = vmatpush1.msra.mxu0 0.0
      %639 = vmatprep.subr.mxu0 0.0
      %640 = vmatpush1.msra.mxu0 0.0
      %641 = vmatprep.subr.mxu0 0.0
      %642 = vmatpush1.msra.mxu0 0.0
      %643 = vmatprep.subr.mxu0 0.0
      %644 = vmatpush1.msra.mxu0 0.0
      %645 = vmatprep.subr.mxu0 0.0
      %646 = vmatpush1.msra.mxu0 0.0
      %647 = vmatprep.subr.mxu0 0.0
      %648 = vmatpush1.msra.mxu0 0.0
      %649 = vmatprep.subr.mxu0 0.0
      %650 = vmatpush1.msra.mxu0 0.0
      %651 = vmatprep.subr.mxu0 0.0
      %652 = vmatpush1.msra.mxu0 0.0
      %653 = vmatprep.subr.mxu0 0.0
      %654 = vmatpush1.msra.mxu0 0.0
      %655 = vmatprep.subr.mxu0 0.0
      %656 = vmatpush1.msra.mxu0 0.0
      %657 = vmatprep.subr.mxu0 0.0
      %658 = vmatpush1.msra.mxu0 %v222
      %659 = vmatprep.subr.mxu0 0.0
      %660 = vmatpush1.msra.mxu0 %v221
      %661 = vmatprep.subr.mxu0 0.0
      %662 = vmatpush2.msra.mxu0 0.0
      %663 = vmatprep.subr.mxu0 0.0
      %664 = vmatpush2.msra.mxu0 0.0
      %665 = vmatprep.subr.mxu0 0.0
      %666 = vmatpush2.msra.mxu0 0.0
      %667 = vmatprep.subr.mxu0 0.0
      %668 = vmatpush2.msra.mxu0 0.0
      %669 = vmatprep.subr.mxu0 0.0
      %670 = vmatpush2.msra.mxu0 0.0
      %671 = vmatprep.subr.mxu0 0.0
      %672 = vmatpush2.msra.mxu0 0.0
      %673 = vmatprep.subr.mxu0 0.0
      %674 = vmatpush2.msra.mxu0 0.0
      %675 = vmatprep.subr.mxu0 0.0
      %676 = vmatpush2.msra.mxu0 0.0
      %677 = vmatprep.subr.mxu0 0.0
      %678 = vmatpush2.msra.mxu0 0.0
      %679 = vmatprep.subr.mxu0 0.0
      %680 = vmatpush2.msra.mxu0 0.0
      %681 = vmatprep.subr.mxu0 0.0
      %682 = vmatpush2.msra.mxu0 0.0
      %683 = vmatprep.subr.mxu0 0.0
      %684 = vmatpush2.msra.mxu0 0.0
      %685 = vmatprep.subr.mxu0 0.0
      %686 = vmatpush2.msra.mxu0 0.0
      %687 = vmatprep.subr.mxu0 0.0
      %688 = vmatpush2.msra.mxu0 0.0
      %689 = vmatprep.subr.mxu0 0.0
      %690 = vmatpush2.msra.mxu0 0.0
      %691 = vmatprep.subr.mxu0 0.0
      %692 = vmatpush2.msra.mxu0 0.0
      %693 = vmatprep.mubr.f32.mxu0 0.0
      %694 = vmatmul.mubr.f32.gmra.mxu0 %v267
      %v695 = vpop.f32.mrf.mxu0
      %v696 = vadd.f32 0.0, %v695
      %v697 = vpop.f32.mrf.mxu0
      %698 = vmatprep.mubr.f32.mxu0 0.0
      %699 = vmatmul.mubr.f32.gmra.mxu0 %v269
      %v700 = vpop.f32.mrf.mxu0
      %v701 = vadd.f32 0.0, %v700
      %v702 = vpop.f32.mrf.mxu0
      %703 = vmatprep.mubr.f32.mxu0 0.0
      %704 = vmatmul.mubr.f32.gmra.mxu0 %v271
      %v705 = vpop.f32.mrf.mxu0
      %v706 = vadd.f32 0.0, %v705
      %v707 = vpop.f32.mrf.mxu0
      %708 = vmatprep.mubr.f32.mxu0 0.0
      %709 = vmatmul.mubr.f32.gmra.mxu0 %v273
      %v710 = vpop.f32.mrf.mxu0
      %v711 = vadd.f32 0.0, %v710
      %v712 = vpop.f32.mrf.mxu0
      %713 = vmatprep.mubr.f32.mxu0 0.0
      %714 = vmatmul.mubr.f32.gmra.mxu0 %v275
      %v715 = vpop.f32.mrf.mxu0
      %v716 = vadd.f32 0.0, %v715
      %v717 = vpop.f32.mrf.mxu0
      %718 = vmatprep.mubr.f32.mxu0 0.0
      %719 = vmatmul.mubr.f32.gmra.mxu0 %v277
      %v720 = vpop.f32.mrf.mxu0
      %v721 = vadd.f32 0.0, %v720
      %v722 = vpop.f32.mrf.mxu0
      %723 = vmatprep.mubr.f32.mxu0 0.0
      %724 = vmatmul.mubr.f32.gmra.mxu0 %v279
      %v725 = vpop.f32.mrf.mxu0
      %v726 = vadd.f32 0.0, %v725
      %v727 = vpop.f32.mrf.mxu0
      %728 = vmatprep.mubr.f32.mxu0 0.0
      %729 = vmatmul.mubr.f32.gmra.mxu0 %v627
      %v730 = vpop.f32.mrf.mxu0
      %v731 = vadd.f32 0.0, %v730
      %v732 = vpop.f32.mrf.mxu0
      %733 = vdwg.mxu0
      %v734 = vadd.f32 %v615, %v696
      %v735 = vadd.f32 %v616, %v701
      %v736 = vadd.f32 %v617, %v706
      %v737 = vadd.f32 %v618, %v711
      %v738 = vadd.f32 %v619, %v716
      %v739 = vadd.f32 %v620, %v721
      %v740 = vadd.f32 %v621, %v726
      %v741 = vadd.f32 %v622, %v731
      %v742 = vld [vmem:[%s2] sm:$0x1]
      %v744 = vlaneseq
      %v745 = vshrl.u32 %v744, 7
      %v746 = vsub.s32 0, %v745
      %v747 = vrot.slane %v742, %v746
      %v749 = vadd.f32 %v734, %v747
      %v750 = vadd.f32 %v735, %v747
      %v751 = vadd.f32 %v736, %v747
      %v752 = vadd.f32 %v737, %v747
      %v753 = vadd.f32 %v738, %v747
      %v754 = vadd.f32 %v739, %v747
      %v755 = vadd.f32 %v740, %v747
      %v756 = vadd.f32 %v741, %v747
      %vm757 = vcmp.ge.f32.partialorder %v749, 0.0
      %vm758 = vcmp.ge.f32.partialorder %v750, 0.0
      %vm759 = vcmp.ge.f32.partialorder %v751, 0.0
      %vm760 = vcmp.ge.f32.partialorder %v752, 0.0
      %vm761 = vcmp.ge.f32.partialorder %v753, 0.0
      %vm762 = vcmp.ge.f32.partialorder %v754, 0.0
      %vm763 = vcmp.ge.f32.partialorder %v755, 0.0
      %vm764 = vcmp.ge.f32.partialorder %v756, 0.0
      %v765 = vmul.f32 %v749, 0.01
      %v766 = vmul.f32 %v750, 0.01
      %v767 = vmul.f32 %v751, 0.01
      %v768 = vmul.f32 %v752, 0.01
      %v769 = vmul.f32 %v753, 0.01
      %v770 = vmul.f32 %v754, 0.01
      %v771 = vmul.f32 %v755, 0.01
      %v772 = vmul.f32 %v756, 0.01
      %v773 = vsel %vm757, %v749, %v765
      %v774 = vsel %vm758, %v750, %v766
      %v775 = vsel %vm759, %v751, %v767
      %v776 = vsel %vm760, %v752, %v768
      %v777 = vsel %vm761, %v753, %v769
      %v778 = vsel %vm762, %v754, %v770
      %v779 = vsel %vm763, %v755, %v771
      %v780 = vsel %vm764, %v756, %v772
      %vm781 = vcmask 64512
      %782 = vst.msk [vmem:[%s170] sm:$0xff] %vm781, %v773
      %783 = vst.msk [vmem:[%s170 + $0x8] sm:$0xff] %vm781, %v774
      %784 = vst.msk [vmem:[%s170 + $0x10] sm:$0xff] %vm781, %v775
      %785 = vst.msk [vmem:[%s170 + $0x18] sm:$0xff] %vm781, %v776
      %786 = vst.msk [vmem:[%s170 + $0x20] sm:$0xff] %vm781, %v777
      %787 = vst.msk [vmem:[%s170 + $0x28] sm:$0xff] %vm781, %v778
      %788 = vst.msk [vmem:[%s170 + $0x30] sm:$0xff] %vm781, %v779
      %789 = vst.msk [vmem:[%s170 + $0x38] sm:$0xff] %vm781, %v780
      %p790 = scmp.lt.s32.totalorder %s14, 1
      %s791 = scalar_select %p790, %s14, 1
      %s792 = smul.addr %s791, 8
      %s793 = smul.addr %s792, 8
      %s794 = scalar_lea.vmem %s3, %s793
      // Predicated region
      $region33: #{simple_segmentation_forward.4} parent=31 // pred_check
        %p795 = pneg %p100
      $region34: #{simple_segmentation_forward.4} parent=31 // pred_check_branch
        %797 = sbr.rel (%p795) target = $region36
      $region35: #{simple_segmentation_forward.4} parent=31 // pred_region
        _
      $region36: #{simple_segmentation_forward.4} parent=31 // pred_fallthru
        _
    $region32: #{simple_segmentation_forward.4} parent=5 // pred_fallthru
      _
    %p798 = scmp.le.s32.totalorder 2, %s9
    // Predicated region
    $region37: #{simple_segmentation_forward.4} parent=5 // pred_check
      %p799 = pneg %p798
    $region38: #{simple_segmentation_forward.4} parent=5 // pred_check_branch
      %801 = sbr.rel (%p799) target = $region40
    $region39: #{simple_segmentation_forward.4} parent=5 // pred_region
      %s802 = ssub.s32 %s9, 2
      // Predicated region
      $region41: #{simple_segmentation_forward.4} parent=39 // pred_check
        %p803 = pneg %p106
      $region42: #{simple_segmentation_forward.4} parent=39 // pred_check_branch
        %805 = sbr.rel (%p803) target = $region44
      $region43: #{simple_segmentation_forward.4} parent=39 // pred_region
        %p806 = scmp.lt.s32.totalorder %s15, 1
        %s807 = scalar_select %p806, %s15, 1
        %s808 = smul.addr %s807, 8
        %s809 = smul.addr %s808, 8
        %s810 = scalar_lea.vmem %s3, %s809
      $region44: #{simple_segmentation_forward.4} parent=39 // pred_fallthru
        _
    $region40: #{simple_segmentation_forward.4} parent=5 // pred_fallthru
      _
  $region6: #{simple_segmentation_forward.4} parent=0 // loop_footer
    %s13 = sadd.s32 1, %s9
  $region7: #{simple_segmentation_forward.4} parent=0 // loop_footer_branch
    %8 = sbr.rel target = $region3
  $region8: #{simple_segmentation_forward.4} parent=0 // loop_exit
    _

// kernel: simple_segmentation_forward.6
$region0: #{simple_segmentation_forward.6}
  #allocation0 [shape = 'u32[]', space=smem, size = 0x4, offset = 0x4, fixed_abs, tag = 'smem constant byte address 0x4 - core index']
  #allocation1 [shape = 'u32[144,128]{1,0:T(1,128)}', space=vmem, size = 0x12000, scoped, tag = 'internal scratch']
  %s0 = inlined_call_operand.vmem [shape: bf16[32,16], index: 0, kind: input, shape index: {}]
  %s1 = inlined_call_operand.vmem [shape: bf16[16,32], index: 1, kind: input, shape index: {}]
  %s2 = inlined_call_operand.vmem [shape: f32[1,32], index: 2, kind: input, shape index: {}]
  %s3 = inlined_call_operand.vmem [shape: bf16[32,8], index: 3, kind: input, shape index: {}]
  %s4 = inlined_call_operand.vmem [shape: f32[1,8], index: 4, kind: input, shape index: {}]
  %s5 = inlined_call_operand.vmem [shape: f32[32,8], index: 5, kind: output, shape index: {}]
  %s6 = sld [smem:[#allocation0]]
  $region30: #{simple_segmentation_forward.6} parent=0
    _
  %s8 = ssub.s32 1, %s6
  %s9 = scalar_select 0, %s8, %s6
  // Predicated region
  $region2: #{simple_segmentation_forward.6} parent=0 // pred_check
    _
  $region3: #{simple_segmentation_forward.6} parent=0 // pred_check_branch
    %11 = sbr.rel (0) target = $region5
  $region4: #{simple_segmentation_forward.6} parent=0 // pred_region
    _
  $region5: #{simple_segmentation_forward.6} parent=0 // pred_fallthru
    _
  // Predicated region
  $region6: #{simple_segmentation_forward.6} parent=0 // pred_check
    _
  $region7: #{simple_segmentation_forward.6} parent=0 // pred_check_branch
    %13 = sbr.rel (0) target = $region9
  $region8: #{simple_segmentation_forward.6} parent=0 // pred_region
    _
  $region9: #{simple_segmentation_forward.6} parent=0 // pred_fallthru
    _
  // Predicated region
  $region10: #{simple_segmentation_forward.6} parent=0 // pred_check
    _
  $region11: #{simple_segmentation_forward.6} parent=0 // pred_check_branch
    %15 = sbr.rel (0) target = $region13
  $region12: #{simple_segmentation_forward.6} parent=0 // pred_region
    _
  $region13: #{simple_segmentation_forward.6} parent=0 // pred_fallthru
    _
  // Predicated region
  $region14: #{simple_segmentation_forward.6} parent=0 // pred_check
    _
  $region15: #{simple_segmentation_forward.6} parent=0 // pred_check_branch
    %17 = sbr.rel (0) target = $region17
  $region16: #{simple_segmentation_forward.6} parent=0 // pred_region
    _
  $region17: #{simple_segmentation_forward.6} parent=0 // pred_fallthru
    _
  // Predicated region
  $region18: #{simple_segmentation_forward.6} parent=0 // pred_check
    _
  $region19: #{simple_segmentation_forward.6} parent=0 // pred_check_branch
    %19 = sbr.rel (0) target = $region21
  $region20: #{simple_segmentation_forward.6} parent=0 // pred_region
    _
  $region21: #{simple_segmentation_forward.6} parent=0 // pred_fallthru
    _
  %v21 = vld [vmem:[%s0] sm:$0xf]
  %v22 = vld [vmem:[%s0 + $0x4] sm:$0xf]
  %v23 = vld [vmem:[%s0 + $0x8] sm:$0xf]
  %v24 = vld [vmem:[%s0 + $0xc] sm:$0xf]
  %v25 = vld [vmem:[%s1] sm:$0xf]
  %v26 = vld [vmem:[%s1 + $0x4] sm:$0xf]
  %v27 = vld [vmem:[%s2] sm:$0x1]
  %v29 = vlaneseq
  %v30 = vshrl.u32 %v29, 7
  %v31 = vsub.s32 0, %v30
  %v32 = vrot.slane %v27, %v31
  %v38 = vunpack.c.l.b16 %v21
  %v39 = vunpack.c.l.b16 %v22
  %v40 = vunpack.c.l.b16 %v23
  %v41 = vunpack.c.l.b16 %v24
  %v42 = vpack.c.b16 %v39, %v38
  %v43 = vpack.c.b16 %v41, %v40
  %v46 = vunpack.c.l.b16 %v25
  %v47 = vunpack.c.l.b16 %v26
  %v48 = vpack.c.b16 %v47, %v46
  %vm50 = vcmask 130048
  %v52 = vsel %vm50, %v42, 0
  %v55 = vsel %vm50, %v43, 0
  %57 = vmatprep.subr.bf16.mxu0 0
  %58 = vmatpush1.bf16.msra.mxu0 0
  %59 = vmatprep.subr.bf16.mxu0 0
  %60 = vmatpush1.bf16.msra.mxu0 0
  %61 = vmatprep.subr.bf16.mxu0 0
  %62 = vmatpush1.bf16.msra.mxu0 0
  %63 = vmatprep.subr.bf16.mxu0 0
  %64 = vmatpush1.bf16.msra.mxu0 0
  %65 = vmatprep.subr.bf16.mxu0 0
  %66 = vmatpush1.bf16.msra.mxu0 0
  %67 = vmatprep.subr.bf16.mxu0 0
  %68 = vmatpush1.bf16.msra.mxu0 0
  %69 = vmatprep.subr.bf16.mxu0 0
  %70 = vmatpush1.bf16.msra.mxu0 0
  %71 = vmatprep.subr.bf16.mxu0 0
  %72 = vmatpush1.bf16.msra.mxu0 %v48
  %73 = vmatprep.subr.bf16.mxu0 0
  %74 = vmatpush2.bf16.msra.mxu0 0
  %75 = vmatprep.subr.bf16.mxu0 0
  %76 = vmatpush2.bf16.msra.mxu0 0
  %77 = vmatprep.subr.bf16.mxu0 0
  %78 = vmatpush2.bf16.msra.mxu0 0
  %79 = vmatprep.subr.bf16.mxu0 0
  %80 = vmatpush2.bf16.msra.mxu0 0
  %81 = vmatprep.subr.bf16.mxu0 0
  %82 = vmatpush2.bf16.msra.mxu0 0
  %83 = vmatprep.subr.bf16.mxu0 0
  %84 = vmatpush2.bf16.msra.mxu0 0
  %85 = vmatprep.subr.bf16.mxu0 0
  %86 = vmatpush2.bf16.msra.mxu0 0
  %87 = vmatprep.subr.bf16.mxu0 0
  %88 = vmatpush2.bf16.msra.mxu0 0
  %89 = vmatprep.mubr.bf16.mxu0 0
  %90 = vmatmul.mubr.bf16.gmra.mxu0 %v52
  %v91 = vpop.f32.mrf.mxu0
  %v92 = vadd.f32 %v32, %v91
  %v93 = vpop.f32.mrf.mxu0
  %v94 = vpop.f32.mrf.mxu0
  %v95 = vadd.f32 %v32, %v94
  %v96 = vpop.f32.mrf.mxu0
  %97 = vmatprep.mubr.bf16.mxu0 0
  %98 = vmatmul.mubr.bf16.gmra.mxu0 %v55
  %v99 = vpop.f32.mrf.mxu0
  %v100 = vadd.f32 %v32, %v99
  %v101 = vpop.f32.mrf.mxu0
  %v102 = vpop.f32.mrf.mxu0
  %v103 = vadd.f32 %v32, %v102
  %v104 = vpop.f32.mrf.mxu0
  %105 = vdwg.mxu0
  %vm106 = vcmp.ge.f32.partialorder %v92, 0.0
  %vm107 = vcmp.ge.f32.partialorder %v95, 0.0
  %vm108 = vcmp.ge.f32.partialorder %v100, 0.0
  %vm109 = vcmp.ge.f32.partialorder %v103, 0.0
  %v110 = vmul.f32 %v92, 0.01
  %v111 = vmul.f32 %v95, 0.01
  %v112 = vmul.f32 %v100, 0.01
  %v113 = vmul.f32 %v103, 0.01
  %v114 = vsel %vm106, %v92, %v110
  %v115 = vsel %vm107, %v95, %v111
  %v116 = vsel %vm108, %v100, %v112
  %v117 = vsel %vm109, %v103, %v113
  %v118 = vpack.c.bf16 %v115, %v114
  %v119 = vpack.c.bf16 %v117, %v116
  %v120 = vld [vmem:[%s3] sm:$0xf]
  %v121 = vld [vmem:[%s3 + $0x4] sm:$0xf]
  %v122 = vld [vmem:[%s3 + $0x8] sm:$0xf]
  %v123 = vld [vmem:[%s3 + $0xc] sm:$0xf]
  %v124 = vld [vmem:[%s4] sm:$0x1]
  %v126 = vlaneseq
  %v127 = vshrl.u32 %v126, 7
  %v128 = vsub.s32 0, %v127
  %v129 = vrot.slane %v124, %v128
  %v135 = vunpack.c.l.b16 %v120
  %v136 = vunpack.c.l.b16 %v121
  %v137 = vunpack.c.l.b16 %v122
  %v138 = vunpack.c.l.b16 %v123
  %v139 = vpack.c.b16 %v136, %v135
  %v140 = vpack.c.b16 %v138, %v137
  %vm143 = vcmask 261120
  %v145 = vsel %vm143, %v118, 0
  %v148 = vsel %vm143, %v119, 0
  %150 = vmatprep.subr.bf16.mxu0 0
  %151 = vmatpush1.bf16.msra.mxu0 0
  %152 = vmatprep.subr.bf16.mxu0 0
  %153 = vmatpush1.bf16.msra.mxu0 0
  %154 = vmatprep.subr.bf16.mxu0 0
  %155 = vmatpush1.bf16.msra.mxu0 0
  %156 = vmatprep.subr.bf16.mxu0 0
  %157 = vmatpush1.bf16.msra.mxu0 0
  %158 = vmatprep.subr.bf16.mxu0 0
  %159 = vmatpush1.bf16.msra.mxu0 0
  %160 = vmatprep.subr.bf16.mxu0 0
  %161 = vmatpush1.bf16.msra.mxu0 0
  %162 = vmatprep.subr.bf16.mxu0 0
  %163 = vmatpush1.bf16.msra.mxu0 %v140
  %164 = vmatprep.subr.bf16.mxu0 0
  %165 = vmatpush1.bf16.msra.mxu0 %v139
  %166 = vmatprep.subr.bf16.mxu0 0
  %167 = vmatpush2.bf16.msra.mxu0 0
  %168 = vmatprep.subr.bf16.mxu0 0
  %169 = vmatpush2.bf16.msra.mxu0 0
  %170 = vmatprep.subr.bf16.mxu0 0
  %171 = vmatpush2.bf16.msra.mxu0 0
  %172 = vmatprep.subr.bf16.mxu0 0
  %173 = vmatpush2.bf16.msra.mxu0 0
  %174 = vmatprep.subr.bf16.mxu0 0
  %175 = vmatpush2.bf16.msra.mxu0 0
  %176 = vmatprep.subr.bf16.mxu0 0
  %177 = vmatpush2.bf16.msra.mxu0 0
  %178 = vmatprep.subr.bf16.mxu0 0
  %179 = vmatpush2.bf16.msra.mxu0 0
  %180 = vmatprep.subr.bf16.mxu0 0
  %181 = vmatpush2.bf16.msra.mxu0 0
  %182 = vmatprep.mubr.bf16.mxu0 0
  %183 = vmatmul.mubr.bf16.gmra.mxu0 %v145
  %v184 = vpop.f32.mrf.mxu0
  %v185 = vadd.f32 %v129, %v184
  %v186 = vpop.f32.mrf.mxu0
  %v187 = vpop.f32.mrf.mxu0
  %v188 = vadd.f32 %v129, %v187
  %v189 = vpop.f32.mrf.mxu0
  %190 = vmatprep.mubr.bf16.mxu0 0
  %191 = vmatmul.mubr.bf16.gmra.mxu0 %v148
  %v192 = vpop.f32.mrf.mxu0
  %v193 = vadd.f32 %v129, %v192
  %v194 = vpop.f32.mrf.mxu0
  %v195 = vpop.f32.mrf.mxu0
  %v196 = vadd.f32 %v129, %v195
  %v197 = vpop.f32.mrf.mxu0
  %198 = vdwg.mxu0
  %vm199 = vcmask 64512
  %200 = vst.msk [vmem:[%s5] sm:$0xff] %vm199, %v185
  %201 = vst.msk [vmem:[%s5 + $0x8] sm:$0xff] %vm199, %v188
  %202 = vst.msk [vmem:[%s5 + $0x10] sm:$0xff] %vm199, %v193
  %203 = vst.msk [vmem:[%s5 + $0x18] sm:$0xff] %vm199, %v196
  // Predicated region
  $region22: #{simple_segmentation_forward.6} parent=0 // pred_check
    _
  $region23: #{simple_segmentation_forward.6} parent=0 // pred_check_branch
    %205 = sbr.rel (0) target = $region25
  $region24: #{simple_segmentation_forward.6} parent=0 // pred_region
    _
  $region25: #{simple_segmentation_forward.6} parent=0 // pred_fallthru
    _
  // Predicated region
  $region26: #{simple_segmentation_forward.6} parent=0 // pred_check
    _
  $region27: #{simple_segmentation_forward.6} parent=0 // pred_check_branch
    %207 = sbr.rel (0) target = $region29
  $region28: #{simple_segmentation_forward.6} parent=0 // pred_region
    _
  $region29: #{simple_segmentation_forward.6} parent=0 // pred_fallthru
    _

// kernel: simple_segmentation_forward.5
$region0: #{simple_segmentation_forward.5}
  #allocation0 [shape = 'u32[]', space=smem, size = 0x4, offset = 0x4, fixed_abs, tag = 'smem constant byte address 0x4 - core index']
  #allocation1 [shape = 'u32[144,128]{1,0:T(1,128)}', space=vmem, size = 0x12000, scoped, tag = 'internal scratch']
  %s0 = inlined_call_operand.vmem [shape: bf16[2,5,9,32], index: 0, kind: input, shape index: {}]
  %s1 = inlined_call_operand.vmem [shape: bf16[4,32,16], index: 1, kind: input, shape index: {}]
  %s2 = inlined_call_operand.vmem [shape: f32[1,16], index: 2, kind: input, shape index: {}]
  %s3 = inlined_call_operand.vmem [shape: f32[2,4,8,16], index: 3, kind: output, shape index: {}]
  %s4 = sld [smem:[#allocation0]]
  $region45: #{simple_segmentation_forward.5} parent=0
    _
  %s6 = ssub.s32 1, %s4
  %s7 = scalar_select 0, %s6, %s4
  loop: start=0, step=1, limit=4
  $region2: #{simple_segmentation_forward.5} parent=0 // loop_pre_header
    _
  $region3: #{simple_segmentation_forward.5} parent=0 // loop_header
    %s9 = sphi 0, %s13
    %p10 = scmp.ge.s32.totalorder %s9, 4
    %s19 = sphi 0, %s21
    %s22 = sphi 0, %s19
    %s23 = sphi 0, %s22
    %s39 = sphi 0, %s23
    %s43 = sphi 0, %s43
    %s45 = sphi 0, %s43
    %s46 = sphi 0, %s45
    %s60 = sphi 0, %s46
    %s64 = sphi 0, %s64
    %s66 = sphi 0, %s64
    %s67 = sphi 0, %s66
    %s81 = sphi 0, %s67
    %s87 = sphi 0, %s89
    %s90 = sphi 0, %s87
    %s91 = sphi 0, %s90
    %s107 = sphi 0, %s91
  $region4: #{simple_segmentation_forward.5} parent=0 // loop_header_branch
    %12 = sbr.rel (%p10) target = $region8
  $region5: #{simple_segmentation_forward.5} parent=0 // loop_body
    %s14 = ssub.s32 %s9, 1
    %s15 = ssub.s32 %s9, 2
    %s16 = sadd.s32 %s9, 1
    %s17 = ssub.s32 %s9, %s16
    %p18 = scmp.eq.s32.totalorder %s17, 0
    %s20 = sadd.s32 %s19, 1
    %s21 = scalar_select %p18, %s19, %s20
    %p24 = pneg %p18
    %p25 = scmp.eq.s32.totalorder %s9, 1
    %p26 = por %p24, %p25
    %p27 = scmp.ne.s32.totalorder %s19, %s22
    %p28 = scmp.eq.s32.totalorder %s9, 0
    %p29 = por %p27, %p28
    %p30 = scmp.ne.s32.totalorder %s19, %s22
    %p31 = scmp.eq.s32.totalorder %s14, 1
    %p32 = por %p30, %p31
    %p33 = scmp.ne.s32.totalorder %s22, %s23
    %p34 = scmp.eq.s32.totalorder %s14, 0
    %p35 = por %p33, %p34
    %p36 = scmp.ne.s32.totalorder %s22, %s23
    %p37 = scmp.eq.s32.totalorder %s15, 1
    %p38 = por %p36, %p37
    %p40 = scmp.ne.s32.totalorder %s23, %s39
    %p41 = scmp.eq.s32.totalorder %s15, 0
    %p42 = por %p40, %p41
    %s44 = sadd.s32 %s43, 1
    %p47 = scmp.eq.s32.totalorder %s9, 1
    %p48 = scmp.ne.s32.totalorder %s43, %s45
    %p49 = scmp.eq.s32.totalorder %s9, 0
    %p50 = por %p48, %p49
    %p51 = scmp.ne.s32.totalorder %s43, %s45
    %p52 = scmp.eq.s32.totalorder %s14, 1
    %p53 = por %p51, %p52
    %p54 = scmp.ne.s32.totalorder %s45, %s46
    %p55 = scmp.eq.s32.totalorder %s14, 0
    %p56 = por %p54, %p55
    %p57 = scmp.ne.s32.totalorder %s45, %s46
    %p58 = scmp.eq.s32.totalorder %s15, 1
    %p59 = por %p57, %p58
    %p61 = scmp.ne.s32.totalorder %s46, %s60
    %p62 = scmp.eq.s32.totalorder %s15, 0
    %p63 = por %p61, %p62
    %s65 = sadd.s32 %s64, 1
    %p68 = scmp.eq.s32.totalorder %s9, 1
    %p69 = scmp.ne.s32.totalorder %s64, %s66
    %p70 = scmp.eq.s32.totalorder %s9, 0
    %p71 = por %p69, %p70
    %p72 = scmp.ne.s32.totalorder %s64, %s66
    %p73 = scmp.eq.s32.totalorder %s14, 1
    %p74 = por %p72, %p73
    %p75 = scmp.ne.s32.totalorder %s66, %s67
    %p76 = scmp.eq.s32.totalorder %s14, 0
    %p77 = por %p75, %p76
    %p78 = scmp.ne.s32.totalorder %s66, %s67
    %p79 = scmp.eq.s32.totalorder %s15, 1
    %p80 = por %p78, %p79
    %p82 = scmp.ne.s32.totalorder %s67, %s81
    %p83 = scmp.eq.s32.totalorder %s15, 0
    %p84 = por %p82, %p83
    %s85 = ssub.s32 %s9, %s16
    %p86 = scmp.eq.s32.totalorder %s85, 0
    %s88 = sadd.s32 %s87, 1
    %s89 = scalar_select %p86, %s87, %s88
    %p92 = pneg %p86
    %p93 = scmp.eq.s32.totalorder %s9, 1
    %p94 = por %p92, %p93
    %p95 = scmp.ne.s32.totalorder %s87, %s90
    %p96 = scmp.eq.s32.totalorder %s9, 0
    %p97 = por %p95, %p96
    %p98 = scmp.ne.s32.totalorder %s87, %s90
    %p99 = scmp.eq.s32.totalorder %s14, 1
    %p100 = por %p98, %p99
    %p101 = scmp.ne.s32.totalorder %s90, %s91
    %p102 = scmp.eq.s32.totalorder %s14, 0
    %p103 = por %p101, %p102
    %p104 = scmp.ne.s32.totalorder %s90, %s91
    %p105 = scmp.eq.s32.totalorder %s15, 1
    %p106 = por %p104, %p105
    %p108 = scmp.ne.s32.totalorder %s91, %s107
    %p109 = scmp.eq.s32.totalorder %s15, 0
    %p110 = por %p108, %p109
    %p111 = scmp.le.s32.totalorder 1, %s9
    %p112 = scmp.lt.s32.totalorder %s9, 3
    %p113 = pnand %p111, %p112
    %p114 = pneg %p113
    // Predicated region
    $region9: #{simple_segmentation_forward.5} parent=5 // pred_check
      _
    $region10: #{simple_segmentation_forward.5} parent=5 // pred_check_branch
      %116 = sbr.rel (%p113) target = $region12
    $region11: #{simple_segmentation_forward.5} parent=5 // pred_region
      %s117 = ssub.s32 %s9, 1
      // Predicated region
      $region13: #{simple_segmentation_forward.5} parent=11 // pred_check
        %p118 = pneg %p56
      $region14: #{simple_segmentation_forward.5} parent=11 // pred_check_branch
        %120 = sbr.rel (%p118) target = $region16
      $region15: #{simple_segmentation_forward.5} parent=11 // pred_region
        _
      $region16: #{simple_segmentation_forward.5} parent=11 // pred_fallthru
        _
      // Predicated region
      $region17: #{simple_segmentation_forward.5} parent=11 // pred_check
        %p121 = pneg %p77
      $region18: #{simple_segmentation_forward.5} parent=11 // pred_check_branch
        %123 = sbr.rel (%p121) target = $region20
      $region19: #{simple_segmentation_forward.5} parent=11 // pred_region
        _
      $region20: #{simple_segmentation_forward.5} parent=11 // pred_fallthru
        _
    $region12: #{simple_segmentation_forward.5} parent=5 // pred_fallthru
      _
    %p124 = scmp.lt.s32.totalorder %s9, 2
    // Predicated region
    $region21: #{simple_segmentation_forward.5} parent=5 // pred_check
      %p125 = pneg %p124
    $region22: #{simple_segmentation_forward.5} parent=5 // pred_check_branch
      %127 = sbr.rel (%p125) target = $region24
    $region23: #{simple_segmentation_forward.5} parent=5 // pred_region
      // Predicated region
      $region25: #{simple_segmentation_forward.5} parent=23 // pred_check
        %p128 = pneg %p29
      $region26: #{simple_segmentation_forward.5} parent=23 // pred_check_branch
        %130 = sbr.rel (%p128) target = $region28
      $region27: #{simple_segmentation_forward.5} parent=23 // pred_region
        %p131 = scmp.lt.s32.totalorder %s9, 1
        %s132 = scalar_select %p131, %s9, 1
        %s133 = smul.addr %s132, 10
        %s134 = smul.addr %s133, 4
        %s135 = scalar_lea.vmem %s0, %s134
      $region28: #{simple_segmentation_forward.5} parent=23 // pred_fallthru
        _
    $region24: #{simple_segmentation_forward.5} parent=5 // pred_fallthru
      _
    %p136 = scmp.le.s32.totalorder 1, %s9
    %p137 = scmp.lt.s32.totalorder %s9, 3
    %p138 = pnand %p136, %p137
    %p139 = pneg %p138
    // Predicated region
    $region29: #{simple_segmentation_forward.5} parent=5 // pred_check
      _
    $region30: #{simple_segmentation_forward.5} parent=5 // pred_check_branch
      %141 = sbr.rel (%p138) target = $region32
    $region31: #{simple_segmentation_forward.5} parent=5 // pred_region
      %s142 = ssub.s32 %s9, 1
      %p143 = scmp.lt.s32.totalorder %s14, 1
      %s144 = scalar_select %p143, %s14, 1
      %s145 = smul.addr %s144, 10
      %s146 = smul.addr %s145, 4
      %s147 = scalar_lea.vmem %s0, %s146
      %p148 = pneg %p35
      %p149 = pneg %p32
      %p150 = pneg %p56
      %p151 = pneg %p53
      %p152 = pneg %p77
      %p153 = pneg %p74
      %p154 = pneg %p103
      %p155 = pneg %p100
      %p156 = scmp.lt.s32.totalorder %s14, 1
      %s157 = scalar_select %p156, %s14, 1
      %s158 = smul.addr %s157, 4
      %s159 = smul.addr %s158, 8
      %s160 = scalar_lea.vmem %s3, %s159
      %p161 = scmp.lt.s32.totalorder %s14, 1
      %s162 = scalar_select %p161, %s14, 1
      %s163 = smul.addr %s162, 10
      %s164 = smul.addr %s163, 4
      %s165 = scalar_lea.vmem %s0, %s164
      %p166 = scmp.lt.s32.totalorder %s14, 1
      %s167 = scalar_select %p166, %s14, 1
      %s168 = smul.addr %s167, 4
      %s169 = smul.addr %s168, 8
      %s170 = scalar_lea.vmem %s3, %s169
      %v171 = vld [vmem:[%s165] sm:$0xf]
      %v172 = vld [vmem:[%s165 + $0x4] sm:$0x1]
      %v173 = vld [vmem:[%s165 + $0x8] sm:$0xf]
      %v174 = vld [vmem:[%s165 + $0xc] sm:$0x1]
      %v175 = vld [vmem:[%s165 + $0x10] sm:$0xf]
      %v176 = vld [vmem:[%s165 + $0x14] sm:$0x1]
      %v177 = vld [vmem:[%s165 + $0x18] sm:$0xf]
      %v178 = vld [vmem:[%s165 + $0x1c] sm:$0x1]
      %v179 = vld [vmem:[%s165 + $0x20] sm:$0xf]
      %v180 = vld [vmem:[%s165 + $0x24] sm:$0x1]
      %v181 = vunpack.c.l.bf16 %v171
      %v182 = vunpack.c.l.bf16 %v172
      %v183 = vunpack.c.l.bf16 %v173
      %v184 = vunpack.c.l.bf16 %v174
      %v185 = vunpack.c.l.bf16 %v175
      %v186 = vunpack.c.l.bf16 %v176
      %v187 = vunpack.c.l.bf16 %v177
      %v188 = vunpack.c.l.bf16 %v178
      %v189 = vunpack.c.l.bf16 %v179
      %v190 = vunpack.c.l.bf16 %v180
      %v191 = vld [vmem:[%s1] sm:$0xf]
      %v192 = vld [vmem:[%s1 + $0x4] sm:$0xf]
      %v193 = vld [vmem:[%s1 + $0x8] sm:$0xf]
      %v194 = vld [vmem:[%s1 + $0xc] sm:$0xf]
      %v195 = vld [vmem:[%s1 + $0x10] sm:$0xf]
      %v196 = vld [vmem:[%s1 + $0x14] sm:$0xf]
      %v197 = vld [vmem:[%s1 + $0x18] sm:$0xf]
      %v198 = vld [vmem:[%s1 + $0x1c] sm:$0xf]
      %v199 = vld [vmem:[%s1 + $0x20] sm:$0xf]
      %v200 = vld [vmem:[%s1 + $0x24] sm:$0xf]
      %v201 = vld [vmem:[%s1 + $0x28] sm:$0xf]
      %v202 = vld [vmem:[%s1 + $0x2c] sm:$0xf]
      %v203 = vld [vmem:[%s1 + $0x30] sm:$0xf]
      %v204 = vld [vmem:[%s1 + $0x34] sm:$0xf]
      %v205 = vld [vmem:[%s1 + $0x38] sm:$0xf]
      %v206 = vld [vmem:[%s1 + $0x3c] sm:$0xf]
      %v207 = vunpack.c.l.bf16 %v191
      %v208 = vunpack.c.l.bf16 %v192
      %v209 = vunpack.c.l.bf16 %v193
      %v210 = vunpack.c.l.bf16 %v194
      %v211 = vunpack.c.l.bf16 %v195
      %v212 = vunpack.c.l.bf16 %v196
      %v213 = vunpack.c.l.bf16 %v197
      %v214 = vunpack.c.l.bf16 %v198
      %v215 = vunpack.c.l.bf16 %v199
      %v216 = vunpack.c.l.bf16 %v200
      %v217 = vunpack.c.l.bf16 %v201
      %v218 = vunpack.c.l.bf16 %v202
      %v219 = vunpack.c.l.bf16 %v203
      %v220 = vunpack.c.l.bf16 %v204
      %v221 = vunpack.c.l.bf16 %v205
      %v222 = vunpack.c.l.bf16 %v206
      %vm231 = vcmask 1046528
      %v232 = vrot.slane %v181, 1
      %v233 = vrot.slane %v182, 1
      %v234 = vsel %vm231, %v232, %v233
      %v235 = vrot.slane %v183, 1
      %v236 = vrot.slane %v184, 1
      %v237 = vsel %vm231, %v235, %v236
      %v238 = vrot.slane %v185, 1
      %v239 = vrot.slane %v186, 1
      %v240 = vsel %vm231, %v238, %v239
      %v241 = vrot.slane %v187, 1
      %v242 = vrot.slane %v188, 1
      %v243 = vsel %vm231, %v241, %v242
      %vm244 = vcmask 261120
      %v245 = vsel %vm244, %v234, 0
      %v247 = vsel %vm244, %v237, 0
      %v249 = vsel %vm244, %v240, 0
      %v251 = vsel %vm244, %v243, 0
      %253 = vmatprep.subr.mxu0 0.0
      %254 = vmatpush1.msra.mxu0 0.0
      %255 = vmatprep.subr.mxu0 0.0
      %256 = vmatpush1.msra.mxu0 0.0
      %257 = vmatprep.subr.mxu0 0.0
      %258 = vmatpush1.msra.mxu0 0.0
      %259 = vmatprep.subr.mxu0 0.0
      %260 = vmatpush1.msra.mxu0 0.0
      %261 = vmatprep.subr.mxu0 0.0
      %262 = vmatpush1.msra.mxu0 0.0
      %263 = vmatprep.subr.mxu0 0.0
      %264 = vmatpush1.msra.mxu0 0.0
      %265 = vmatprep.subr.mxu0 0.0
      %266 = vmatpush1.msra.mxu0 0.0
      %267 = vmatprep.subr.mxu0 0.0
      %268 = vmatpush1.msra.mxu0 0.0
      %269 = vmatprep.subr.mxu0 0.0
      %270 = vmatpush1.msra.mxu0 0.0
      %271 = vmatprep.subr.mxu0 0.0
      %272 = vmatpush1.msra.mxu0 0.0
      %273 = vmatprep.subr.mxu0 0.0
      %274 = vmatpush1.msra.mxu0 0.0
      %275 = vmatprep.subr.mxu0 0.0
      %276 = vmatpush1.msra.mxu0 0.0
      %277 = vmatprep.subr.mxu0 0.0
      %278 = vmatpush1.msra.mxu0 %v214
      %279 = vmatprep.subr.mxu0 0.0
      %280 = vmatpush1.msra.mxu0 %v213
      %281 = vmatprep.subr.mxu0 0.0
      %282 = vmatpush1.msra.mxu0 %v212
      %283 = vmatprep.subr.mxu0 0.0
      %284 = vmatpush1.msra.mxu0 %v211
      %285 = vmatprep.subr.mxu0 0.0
      %286 = vmatpush2.msra.mxu0 0.0
      %287 = vmatprep.subr.mxu0 0.0
      %288 = vmatpush2.msra.mxu0 0.0
      %289 = vmatprep.subr.mxu0 0.0
      %290 = vmatpush2.msra.mxu0 0.0
      %291 = vmatprep.subr.mxu0 0.0
      %292 = vmatpush2.msra.mxu0 0.0
      %293 = vmatprep.subr.mxu0 0.0
      %294 = vmatpush2.msra.mxu0 0.0
      %295 = vmatprep.subr.mxu0 0.0
      %296 = vmatpush2.msra.mxu0 0.0
      %297 = vmatprep.subr.mxu0 0.0
      %298 = vmatpush2.msra.mxu0 0.0
      %299 = vmatprep.subr.mxu0 0.0
      %300 = vmatpush2.msra.mxu0 0.0
      %301 = vmatprep.subr.mxu0 0.0
      %302 = vmatpush2.msra.mxu0 0.0
      %303 = vmatprep.subr.mxu0 0.0
      %304 = vmatpush2.msra.mxu0 0.0
      %305 = vmatprep.subr.mxu0 0.0
      %306 = vmatpush2.msra.mxu0 0.0
      %307 = vmatprep.subr.mxu0 0.0
      %308 = vmatpush2.msra.mxu0 0.0
      %309 = vmatprep.subr.mxu0 0.0
      %310 = vmatpush2.msra.mxu0 0.0
      %311 = vmatprep.subr.mxu0 0.0
      %312 = vmatpush2.msra.mxu0 0.0
      %313 = vmatprep.subr.mxu0 0.0
      %314 = vmatpush2.msra.mxu0 0.0
      %315 = vmatprep.subr.mxu0 0.0
      %316 = vmatpush2.msra.mxu0 0.0
      %317 = vmatprep.mubr.f32.mxu0 0.0
      %318 = vmatmul.mubr.f32.gmra.mxu0 %v245
      %v319 = vpop.f32.mrf.mxu0
      %v320 = vadd.f32 0.0, %v319
      %v321 = vpop.f32.mrf.mxu0
      %322 = vmatprep.mubr.f32.mxu0 0.0
      %323 = vmatmul.mubr.f32.gmra.mxu0 %v247
      %v324 = vpop.f32.mrf.mxu0
      %v325 = vadd.f32 0.0, %v324
      %v326 = vpop.f32.mrf.mxu0
      %327 = vmatprep.mubr.f32.mxu0 0.0
      %328 = vmatmul.mubr.f32.gmra.mxu0 %v249
      %v329 = vpop.f32.mrf.mxu0
      %v330 = vadd.f32 0.0, %v329
      %v331 = vpop.f32.mrf.mxu0
      %332 = vmatprep.mubr.f32.mxu0 0.0
      %333 = vmatmul.mubr.f32.gmra.mxu0 %v251
      %v334 = vpop.f32.mrf.mxu0
      %v335 = vadd.f32 0.0, %v334
      %v336 = vpop.f32.mrf.mxu0
      %337 = vdwg.mxu0
      %v338 = vsel %vm244, %v181, 0
      %v340 = vsel %vm244, %v183, 0
      %v342 = vsel %vm244, %v185, 0
      %v344 = vsel %vm244, %v187, 0
      %346 = vmatprep.subr.mxu0 0.0
      %347 = vmatpush1.msra.mxu0 0.0
      %348 = vmatprep.subr.mxu0 0.0
      %349 = vmatpush1.msra.mxu0 0.0
      %350 = vmatprep.subr.mxu0 0.0
      %351 = vmatpush1.msra.mxu0 0.0
      %352 = vmatprep.subr.mxu0 0.0
      %353 = vmatpush1.msra.mxu0 0.0
      %354 = vmatprep.subr.mxu0 0.0
      %355 = vmatpush1.msra.mxu0 0.0
      %356 = vmatprep.subr.mxu0 0.0
      %357 = vmatpush1.msra.mxu0 0.0
      %358 = vmatprep.subr.mxu0 0.0
      %359 = vmatpush1.msra.mxu0 0.0
      %360 = vmatprep.subr.mxu0 0.0
      %361 = vmatpush1.msra.mxu0 0.0
      %362 = vmatprep.subr.mxu0 0.0
      %363 = vmatpush1.msra.mxu0 0.0
      %364 = vmatprep.subr.mxu0 0.0
      %365 = vmatpush1.msra.mxu0 0.0
      %366 = vmatprep.subr.mxu0 0.0
      %367 = vmatpush1.msra.mxu0 0.0
      %368 = vmatprep.subr.mxu0 0.0
      %369 = vmatpush1.msra.mxu0 0.0
      %370 = vmatprep.subr.mxu0 0.0
      %371 = vmatpush1.msra.mxu0 %v210
      %372 = vmatprep.subr.mxu0 0.0
      %373 = vmatpush1.msra.mxu0 %v209
      %374 = vmatprep.subr.mxu0 0.0
      %375 = vmatpush1.msra.mxu0 %v208
      %376 = vmatprep.subr.mxu0 0.0
      %377 = vmatpush1.msra.mxu0 %v207
      %378 = vmatprep.subr.mxu0 0.0
      %379 = vmatpush2.msra.mxu0 0.0
      %380 = vmatprep.subr.mxu0 0.0
      %381 = vmatpush2.msra.mxu0 0.0
      %382 = vmatprep.subr.mxu0 0.0
      %383 = vmatpush2.msra.mxu0 0.0
      %384 = vmatprep.subr.mxu0 0.0
      %385 = vmatpush2.msra.mxu0 0.0
      %386 = vmatprep.subr.mxu0 0.0
      %387 = vmatpush2.msra.mxu0 0.0
      %388 = vmatprep.subr.mxu0 0.0
      %389 = vmatpush2.msra.mxu0 0.0
      %390 = vmatprep.subr.mxu0 0.0
      %391 = vmatpush2.msra.mxu0 0.0
      %392 = vmatprep.subr.mxu0 0.0
      %393 = vmatpush2.msra.mxu0 0.0
      %394 = vmatprep.subr.mxu0 0.0
      %395 = vmatpush2.msra.mxu0 0.0
      %396 = vmatprep.subr.mxu0 0.0
      %397 = vmatpush2.msra.mxu0 0.0
      %398 = vmatprep.subr.mxu0 0.0
      %399 = vmatpush2.msra.mxu0 0.0
      %400 = vmatprep.subr.mxu0 0.0
      %401 = vmatpush2.msra.mxu0 0.0
      %402 = vmatprep.subr.mxu0 0.0
      %403 = vmatpush2.msra.mxu0 0.0
      %404 = vmatprep.subr.mxu0 0.0
      %405 = vmatpush2.msra.mxu0 0.0
      %406 = vmatprep.subr.mxu0 0.0
      %407 = vmatpush2.msra.mxu0 0.0
      %408 = vmatprep.subr.mxu0 0.0
      %409 = vmatpush2.msra.mxu0 0.0
      %410 = vmatprep.mubr.f32.mxu0 0.0
      %411 = vmatmul.mubr.f32.gmra.mxu0 %v338
      %v412 = vpop.f32.mrf.mxu0
      %v413 = vadd.f32 %v320, %v412
      %v414 = vpop.f32.mrf.mxu0
      %415 = vmatprep.mubr.f32.mxu0 0.0
      %416 = vmatmul.mubr.f32.gmra.mxu0 %v340
      %v417 = vpop.f32.mrf.mxu0
      %v418 = vadd.f32 %v325, %v417
      %v419 = vpop.f32.mrf.mxu0
      %420 = vmatprep.mubr.f32.mxu0 0.0
      %421 = vmatmul.mubr.f32.gmra.mxu0 %v342
      %v422 = vpop.f32.mrf.mxu0
      %v423 = vadd.f32 %v330, %v422
      %v424 = vpop.f32.mrf.mxu0
      %425 = vmatprep.mubr.f32.mxu0 0.0
      %426 = vmatmul.mubr.f32.gmra.mxu0 %v344
      %v427 = vpop.f32.mrf.mxu0
      %v428 = vadd.f32 %v335, %v427
      %v429 = vpop.f32.mrf.mxu0
      %430 = vdwg.mxu0
      %v432 = vsel %vm244, %v189, 0
      %434 = vmatprep.subr.mxu0 0.0
      %435 = vmatpush1.msra.mxu0 0.0
      %436 = vmatprep.subr.mxu0 0.0
      %437 = vmatpush1.msra.mxu0 0.0
      %438 = vmatprep.subr.mxu0 0.0
      %439 = vmatpush1.msra.mxu0 0.0
      %440 = vmatprep.subr.mxu0 0.0
      %441 = vmatpush1.msra.mxu0 0.0
      %442 = vmatprep.subr.mxu0 0.0
      %443 = vmatpush1.msra.mxu0 0.0
      %444 = vmatprep.subr.mxu0 0.0
      %445 = vmatpush1.msra.mxu0 0.0
      %446 = vmatprep.subr.mxu0 0.0
      %447 = vmatpush1.msra.mxu0 0.0
      %448 = vmatprep.subr.mxu0 0.0
      %449 = vmatpush1.msra.mxu0 0.0
      %450 = vmatprep.subr.mxu0 0.0
      %451 = vmatpush1.msra.mxu0 0.0
      %452 = vmatprep.subr.mxu0 0.0
      %453 = vmatpush1.msra.mxu0 0.0
      %454 = vmatprep.subr.mxu0 0.0
      %455 = vmatpush1.msra.mxu0 0.0
      %456 = vmatprep.subr.mxu0 0.0
      %457 = vmatpush1.msra.mxu0 0.0
      %458 = vmatprep.subr.mxu0 0.0
      %459 = vmatpush1.msra.mxu0 %v218
      %460 = vmatprep.subr.mxu0 0.0
      %461 = vmatpush1.msra.mxu0 %v217
      %462 = vmatprep.subr.mxu0 0.0
      %463 = vmatpush1.msra.mxu0 %v216
      %464 = vmatprep.subr.mxu0 0.0
      %465 = vmatpush1.msra.mxu0 %v215
      %466 = vmatprep.subr.mxu0 0.0
      %467 = vmatpush2.msra.mxu0 0.0
      %468 = vmatprep.subr.mxu0 0.0
      %469 = vmatpush2.msra.mxu0 0.0
      %470 = vmatprep.subr.mxu0 0.0
      %471 = vmatpush2.msra.mxu0 0.0
      %472 = vmatprep.subr.mxu0 0.0
      %473 = vmatpush2.msra.mxu0 0.0
      %474 = vmatprep.subr.mxu0 0.0
      %475 = vmatpush2.msra.mxu0 0.0
      %476 = vmatprep.subr.mxu0 0.0
      %477 = vmatpush2.msra.mxu0 0.0
      %478 = vmatprep.subr.mxu0 0.0
      %479 = vmatpush2.msra.mxu0 0.0
      %480 = vmatprep.subr.mxu0 0.0
      %481 = vmatpush2.msra.mxu0 0.0
      %482 = vmatprep.subr.mxu0 0.0
      %483 = vmatpush2.msra.mxu0 0.0
      %484 = vmatprep.subr.mxu0 0.0
      %485 = vmatpush2.msra.mxu0 0.0
      %486 = vmatprep.subr.mxu0 0.0
      %487 = vmatpush2.msra.mxu0 0.0
      %488 = vmatprep.subr.mxu0 0.0
      %489 = vmatpush2.msra.mxu0 0.0
      %490 = vmatprep.subr.mxu0 0.0
      %491 = vmatpush2.msra.mxu0 0.0
      %492 = vmatprep.subr.mxu0 0.0
      %493 = vmatpush2.msra.mxu0 0.0
      %494 = vmatprep.subr.mxu0 0.0
      %495 = vmatpush2.msra.mxu0 0.0
      %496 = vmatprep.subr.mxu0 0.0
      %497 = vmatpush2.msra.mxu0 0.0
      %498 = vmatprep.mubr.f32.mxu0 0.0
      %499 = vmatmul.mubr.f32.gmra.mxu0 %v340
      %v500 = vpop.f32.mrf.mxu0
      %v501 = vadd.f32 0.0, %v500
      %v502 = vpop.f32.mrf.mxu0
      %503 = vmatprep.mubr.f32.mxu0 0.0
      %504 = vmatmul.mubr.f32.gmra.mxu0 %v342
      %v505 = vpop.f32.mrf.mxu0
      %v506 = vadd.f32 0.0, %v505
      %v507 = vpop.f32.mrf.mxu0
      %508 = vmatprep.mubr.f32.mxu0 0.0
      %509 = vmatmul.mubr.f32.gmra.mxu0 %v344
      %v510 = vpop.f32.mrf.mxu0
      %v511 = vadd.f32 0.0, %v510
      %v512 = vpop.f32.mrf.mxu0
      %513 = vmatprep.mubr.f32.mxu0 0.0
      %514 = vmatmul.mubr.f32.gmra.mxu0 %v432
      %v515 = vpop.f32.mrf.mxu0
      %v516 = vadd.f32 0.0, %v515
      %v517 = vpop.f32.mrf.mxu0
      %518 = vdwg.mxu0
      %v519 = vadd.f32 %v413, %v501
      %v520 = vadd.f32 %v418, %v506
      %v521 = vadd.f32 %v423, %v511
      %v522 = vadd.f32 %v428, %v516
      %v524 = vrot.slane %v189, 1
      %v525 = vrot.slane %v190, 1
      %v526 = vsel %vm231, %v524, %v525
      %v527 = vsel %vm244, %v526, 0
      %529 = vmatprep.subr.mxu0 0.0
      %530 = vmatpush1.msra.mxu0 0.0
      %531 = vmatprep.subr.mxu0 0.0
      %532 = vmatpush1.msra.mxu0 0.0
      %533 = vmatprep.subr.mxu0 0.0
      %534 = vmatpush1.msra.mxu0 0.0
      %535 = vmatprep.subr.mxu0 0.0
      %536 = vmatpush1.msra.mxu0 0.0
      %537 = vmatprep.subr.mxu0 0.0
      %538 = vmatpush1.msra.mxu0 0.0
      %539 = vmatprep.subr.mxu0 0.0
      %540 = vmatpush1.msra.mxu0 0.0
      %541 = vmatprep.subr.mxu0 0.0
      %542 = vmatpush1.msra.mxu0 0.0
      %543 = vmatprep.subr.mxu0 0.0
      %544 = vmatpush1.msra.mxu0 0.0
      %545 = vmatprep.subr.mxu0 0.0
      %546 = vmatpush1.msra.mxu0 0.0
      %547 = vmatprep.subr.mxu0 0.0
      %548 = vmatpush1.msra.mxu0 0.0
      %549 = vmatprep.subr.mxu0 0.0
      %550 = vmatpush1.msra.mxu0 0.0
      %551 = vmatprep.subr.mxu0 0.0
      %552 = vmatpush1.msra.mxu0 0.0
      %553 = vmatprep.subr.mxu0 0.0
      %554 = vmatpush1.msra.mxu0 %v222
      %555 = vmatprep.subr.mxu0 0.0
      %556 = vmatpush1.msra.mxu0 %v221
      %557 = vmatprep.subr.mxu0 0.0
      %558 = vmatpush1.msra.mxu0 %v220
      %559 = vmatprep.subr.mxu0 0.0
      %560 = vmatpush1.msra.mxu0 %v219
      %561 = vmatprep.subr.mxu0 0.0
      %562 = vmatpush2.msra.mxu0 0.0
      %563 = vmatprep.subr.mxu0 0.0
      %564 = vmatpush2.msra.mxu0 0.0
      %565 = vmatprep.subr.mxu0 0.0
      %566 = vmatpush2.msra.mxu0 0.0
      %567 = vmatprep.subr.mxu0 0.0
      %568 = vmatpush2.msra.mxu0 0.0
      %569 = vmatprep.subr.mxu0 0.0
      %570 = vmatpush2.msra.mxu0 0.0
      %571 = vmatprep.subr.mxu0 0.0
      %572 = vmatpush2.msra.mxu0 0.0
      %573 = vmatprep.subr.mxu0 0.0
      %574 = vmatpush2.msra.mxu0 0.0
      %575 = vmatprep.subr.mxu0 0.0
      %576 = vmatpush2.msra.mxu0 0.0
      %577 = vmatprep.subr.mxu0 0.0
      %578 = vmatpush2.msra.mxu0 0.0
      %579 = vmatprep.subr.mxu0 0.0
      %580 = vmatpush2.msra.mxu0 0.0
      %581 = vmatprep.subr.mxu0 0.0
      %582 = vmatpush2.msra.mxu0 0.0
      %583 = vmatprep.subr.mxu0 0.0
      %584 = vmatpush2.msra.mxu0 0.0
      %585 = vmatprep.subr.mxu0 0.0
      %586 = vmatpush2.msra.mxu0 0.0
      %587 = vmatprep.subr.mxu0 0.0
      %588 = vmatpush2.msra.mxu0 0.0
      %589 = vmatprep.subr.mxu0 0.0
      %590 = vmatpush2.msra.mxu0 0.0
      %591 = vmatprep.subr.mxu0 0.0
      %592 = vmatpush2.msra.mxu0 0.0
      %593 = vmatprep.mubr.f32.mxu0 0.0
      %594 = vmatmul.mubr.f32.gmra.mxu0 %v247
      %v595 = vpop.f32.mrf.mxu0
      %v596 = vadd.f32 0.0, %v595
      %v597 = vpop.f32.mrf.mxu0
      %598 = vmatprep.mubr.f32.mxu0 0.0
      %599 = vmatmul.mubr.f32.gmra.mxu0 %v249
      %v600 = vpop.f32.mrf.mxu0
      %v601 = vadd.f32 0.0, %v600
      %v602 = vpop.f32.mrf.mxu0
      %603 = vmatprep.mubr.f32.mxu0 0.0
      %604 = vmatmul.mubr.f32.gmra.mxu0 %v251
      %v605 = vpop.f32.mrf.mxu0
      %v606 = vadd.f32 0.0, %v605
      %v607 = vpop.f32.mrf.mxu0
      %608 = vmatprep.mubr.f32.mxu0 0.0
      %609 = vmatmul.mubr.f32.gmra.mxu0 %v527
      %v610 = vpop.f32.mrf.mxu0
      %v611 = vadd.f32 0.0, %v610
      %v612 = vpop.f32.mrf.mxu0
      %613 = vdwg.mxu0
      %v614 = vadd.f32 %v519, %v596
      %v615 = vadd.f32 %v520, %v601
      %v616 = vadd.f32 %v521, %v606
      %v617 = vadd.f32 %v522, %v611
      %v618 = vld [vmem:[%s2] sm:$0x1]
      %v620 = vlaneseq
      %v621 = vshrl.u32 %v620, 7
      %v622 = vsub.s32 0, %v621
      %v623 = vrot.slane %v618, %v622
      %v625 = vadd.f32 %v614, %v623
      %v626 = vadd.f32 %v615, %v623
      %v627 = vadd.f32 %v616, %v623
      %v628 = vadd.f32 %v617, %v623
      %vm629 = vcmp.ge.f32.partialorder %v625, 0.0
      %vm630 = vcmp.ge.f32.partialorder %v626, 0.0
      %vm631 = vcmp.ge.f32.partialorder %v627, 0.0
      %vm632 = vcmp.ge.f32.partialorder %v628, 0.0
      %v633 = vmul.f32 %v625, 0.01
      %v634 = vmul.f32 %v626, 0.01
      %v635 = vmul.f32 %v627, 0.01
      %v636 = vmul.f32 %v628, 0.01
      %v637 = vsel %vm629, %v625, %v633
      %v638 = vsel %vm630, %v626, %v634
      %v639 = vsel %vm631, %v627, %v635
      %v640 = vsel %vm632, %v628, %v636
      %vm641 = vcmask 130048
      %642 = vst.msk [vmem:[%s170] sm:$0xff] %vm641, %v637
      %643 = vst.msk [vmem:[%s170 + $0x8] sm:$0xff] %vm641, %v638
      %644 = vst.msk [vmem:[%s170 + $0x10] sm:$0xff] %vm641, %v639
      %645 = vst.msk [vmem:[%s170 + $0x18] sm:$0xff] %vm641, %v640
      %p646 = scmp.lt.s32.totalorder %s14, 1
      %s647 = scalar_select %p646, %s14, 1
      %s648 = smul.addr %s647, 4
      %s649 = smul.addr %s648, 8
      %s650 = scalar_lea.vmem %s3, %s649
      // Predicated region
      $region33: #{simple_segmentation_forward.5} parent=31 // pred_check
        %p651 = pneg %p100
      $region34: #{simple_segmentation_forward.5} parent=31 // pred_check_branch
        %653 = sbr.rel (%p651) target = $region36
      $region35: #{simple_segmentation_forward.5} parent=31 // pred_region
        _
      $region36: #{simple_segmentation_forward.5} parent=31 // pred_fallthru
        _
    $region32: #{simple_segmentation_forward.5} parent=5 // pred_fallthru
      _
    %p654 = scmp.le.s32.totalorder 2, %s9
    // Predicated region
    $region37: #{simple_segmentation_forward.5} parent=5 // pred_check
      %p655 = pneg %p654
    $region38: #{simple_segmentation_forward.5} parent=5 // pred_check_branch
      %657 = sbr.rel (%p655) target = $region40
    $region39: #{simple_segmentation_forward.5} parent=5 // pred_region
      %s658 = ssub.s32 %s9, 2
      // Predicated region
      $region41: #{simple_segmentation_forward.5} parent=39 // pred_check
        %p659 = pneg %p106
      $region42: #{simple_segmentation_forward.5} parent=39 // pred_check_branch
        %661 = sbr.rel (%p659) target = $region44
      $region43: #{simple_segmentation_forward.5} parent=39 // pred_region
        %p662 = scmp.lt.s32.totalorder %s15, 1
        %s663 = scalar_select %p662, %s15, 1
        %s664 = smul.addr %s663, 4
        %s665 = smul.addr %s664, 8
        %s666 = scalar_lea.vmem %s3, %s665
      $region44: #{simple_segmentation_forward.5} parent=39 // pred_fallthru
        _
    $region40: #{simple_segmentation_forward.5} parent=5 // pred_fallthru
      _
  $region6: #{simple_segmentation_forward.5} parent=0 // loop_footer
    %s13 = sadd.s32 1, %s9
  $region7: #{simple_segmentation_forward.5} parent=0 // loop_footer_branch
    %8 = sbr.rel target = $region3
  $region8: #{simple_segmentation_forward.5} parent=0 // loop_exit
    _

// kernel: simple_segmentation_forward.7
$region0: #{simple_segmentation_forward.7}
  #allocation0 [shape = 'u32[]', space=smem, size = 0x4, offset = 0x4, fixed_abs, tag = 'smem constant byte address 0x4 - core index']
  #allocation1 [shape = 'u32[144,128]{1,0:T(1,128)}', space=vmem, size = 0x12000, scoped, tag = 'internal scratch']
  %s0 = inlined_call_operand.vmem [shape: f32[10,4,4], index: 0, kind: input, shape index: {}]
  %s1 = inlined_call_operand.vmem [shape: f32[16,4], index: 1, kind: input, shape index: {}]
  %s2 = inlined_call_operand.vmem [shape: f32[4,16], index: 2, kind: input, shape index: {}]
  %s3 = inlined_call_operand.hbm [shape: f32[10,16,16], index: 3, kind: output, shape index: {}]
  %s4 = sld [smem:[#allocation0]]
  $region45: #{simple_segmentation_forward.7} parent=0
    _
  %s6 = ssub.s32 1, %s4
  %s7 = scalar_select 0, %s6, %s4
  $region1: #{simple_segmentation_forward.7} parent=0
    #allocation2 [shape = 'u8[16384]{0}', space=vmem, size = 0x4000, scoped, tag = 'output window, operand 0']
    #allocation3 [shape = 's32[2]{0}', space=sflag, size = 0x8, scoped, tag = 'scoped memory for simple_segmentation_forward.7']
    %8 = vsyncpa [#allocation3], 0
    %s9 = scalar_lea.sflag [#allocation3], 1
    %10 = vsyncpa %s9, 0
    loop: start=0, step=1, limit=12
    $region2: #{simple_segmentation_forward.7} parent=1 // loop_pre_header
      _
    $region3: #{simple_segmentation_forward.7} parent=1 // loop_header
      %s12 = sphi 0, %s16
      %p13 = scmp.ge.s32.totalorder %s12, 12
      %s19 = sphi 0, %s31
      %s20 = sphi 0, %s27
      %s21 = sphi 0, %s19
      %s22 = sphi 0, %s20
      %s23 = sphi 0, %s21
      %s24 = sphi 0, %s22
      %s34 = sphi 0, %s36
      %s37 = sphi 0, %s34
      %s38 = sphi 0, %s37
      %s54 = sphi 0, %s38
      %s60 = sphi 0, %s62
      %s63 = sphi 0, %s60
      %s64 = sphi 0, %s63
      %s80 = sphi 0, %s64
      %s84 = sphi 0, %s84
      %s86 = sphi 0, %s84
      %s87 = sphi 0, %s86
      %s101 = sphi 0, %s87
      %s109 = sphi 0, %s111
      %s112 = sphi 0, %s109
      %s113 = sphi 0, %s112
      %s129 = sphi 0, %s113
    $region4: #{simple_segmentation_forward.7} parent=1 // loop_header_branch
      %15 = sbr.rel (%p13) target = $region8
    $region5: #{simple_segmentation_forward.7} parent=1 // loop_body
      %s17 = ssub.s32 %s12, 1
      %s18 = ssub.s32 %s12, 2
      %s25 = sadd.s32 1, %s20
      %p26 = scmp.ge.s32.totalorder %s25, 1
      %s27 = scalar_select %p26, 0, %s25
      %s28 = sadd.s32 1, %s19
      %s29 = scalar_select %p26, %s28, %s19
      %p30 = scmp.ge.s32.totalorder %s29, 10
      %s31 = scalar_select %p30, 0, %s29
      %s32 = ssub.s32 %s19, %s31
      %p33 = scmp.eq.s32.totalorder %s32, 0
      %s35 = sadd.s32 %s34, 1
      %s36 = scalar_select %p33, %s34, %s35
      %p39 = pneg %p33
      %p40 = scmp.eq.s32.totalorder %s12, 9
      %p41 = por %p39, %p40
      %p42 = scmp.ne.s32.totalorder %s34, %s37
      %p43 = scmp.eq.s32.totalorder %s12, 0
      %p44 = por %p42, %p43
      %p45 = scmp.ne.s32.totalorder %s34, %s37
      %p46 = scmp.eq.s32.totalorder %s17, 9
      %p47 = por %p45, %p46
      %p48 = scmp.ne.s32.totalorder %s37, %s38
      %p49 = scmp.eq.s32.totalorder %s17, 0
      %p50 = por %p48, %p49
      %p51 = scmp.ne.s32.totalorder %s37, %s38
      %p52 = scmp.eq.s32.totalorder %s18, 9
      %p53 = por %p51, %p52
      %p55 = scmp.ne.s32.totalorder %s38, %s54
      %p56 = scmp.eq.s32.totalorder %s18, 0
      %p57 = por %p55, %p56
      %s58 = ssub.s32 %s20, %s27
      %p59 = scmp.eq.s32.totalorder %s58, 0
      %s61 = sadd.s32 %s60, 1
      %s62 = scalar_select %p59, %s60, %s61
      %p65 = pneg %p59
      %p66 = scmp.eq.s32.totalorder %s12, 9
      %p67 = por %p65, %p66
      %p68 = scmp.ne.s32.totalorder %s60, %s63
      %p69 = scmp.eq.s32.totalorder %s12, 0
      %p70 = por %p68, %p69
      %p71 = scmp.ne.s32.totalorder %s60, %s63
      %p72 = scmp.eq.s32.totalorder %s17, 9
      %p73 = por %p71, %p72
      %p74 = scmp.ne.s32.totalorder %s63, %s64
      %p75 = scmp.eq.s32.totalorder %s17, 0
      %p76 = por %p74, %p75
      %p77 = scmp.ne.s32.totalorder %s63, %s64
      %p78 = scmp.eq.s32.totalorder %s18, 9
      %p79 = por %p77, %p78
      %p81 = scmp.ne.s32.totalorder %s64, %s80
      %p82 = scmp.eq.s32.totalorder %s18, 0
      %p83 = por %p81, %p82
      %s85 = sadd.s32 %s84, 1
      %p88 = scmp.eq.s32.totalorder %s12, 9
      %p89 = scmp.ne.s32.totalorder %s84, %s86
      %p90 = scmp.eq.s32.totalorder %s12, 0
      %p91 = por %p89, %p90
      %p92 = scmp.ne.s32.totalorder %s84, %s86
      %p93 = scmp.eq.s32.totalorder %s17, 9
      %p94 = por %p92, %p93
      %p95 = scmp.ne.s32.totalorder %s86, %s87
      %p96 = scmp.eq.s32.totalorder %s17, 0
      %p97 = por %p95, %p96
      %p98 = scmp.ne.s32.totalorder %s86, %s87
      %p99 = scmp.eq.s32.totalorder %s18, 9
      %p100 = por %p98, %p99
      %p102 = scmp.ne.s32.totalorder %s87, %s101
      %p103 = scmp.eq.s32.totalorder %s18, 0
      %p104 = por %p102, %p103
      %s105 = ssub.s32 %s19, %s31
      %s106 = ssub.s32 %s20, %s27
      %s107 = sor.u32 %s105, %s106
      %p108 = scmp.eq.s32.totalorder %s107, 0
      %s110 = sadd.s32 %s109, 1
      %s111 = scalar_select %p108, %s109, %s110
      %p114 = pneg %p108
      %p115 = scmp.eq.s32.totalorder %s12, 9
      %p116 = por %p114, %p115
      %p117 = scmp.ne.s32.totalorder %s109, %s112
      %p118 = scmp.eq.s32.totalorder %s12, 0
      %p119 = por %p117, %p118
      %p120 = scmp.ne.s32.totalorder %s109, %s112
      %p121 = scmp.eq.s32.totalorder %s17, 9
      %p122 = por %p120, %p121
      %p123 = scmp.ne.s32.totalorder %s112, %s113
      %p124 = scmp.eq.s32.totalorder %s17, 0
      %p125 = por %p123, %p124
      %p126 = scmp.ne.s32.totalorder %s112, %s113
      %p127 = scmp.eq.s32.totalorder %s18, 9
      %p128 = por %p126, %p127
      %p130 = scmp.ne.s32.totalorder %s113, %s129
      %p131 = scmp.eq.s32.totalorder %s18, 0
      %p132 = por %p130, %p131
      %p133 = scmp.le.s32.totalorder 1, %s12
      %p134 = scmp.lt.s32.totalorder %s12, 11
      %p135 = pnand %p133, %p134
      %p136 = pneg %p135
      // Predicated region
      $region9: #{simple_segmentation_forward.7} parent=5 // pred_check
        _
      $region10: #{simple_segmentation_forward.7} parent=5 // pred_check_branch
        %138 = sbr.rel (%p135) target = $region12
      $region11: #{simple_segmentation_forward.7} parent=5 // pred_region
        %s139 = ssub.s32 %s12, 1
        // Predicated region
        $region13: #{simple_segmentation_forward.7} parent=11 // pred_check
          %p140 = pneg %p76
        $region14: #{simple_segmentation_forward.7} parent=11 // pred_check_branch
          %142 = sbr.rel (%p140) target = $region16
        $region15: #{simple_segmentation_forward.7} parent=11 // pred_region
          %s143 = smul.u32 2, %s22
          %p144 = scmp.lt.s32.totalorder %s143, 1
          %s145 = scalar_select %p144, %s143, 1
          %s146 = smul.addr %s145, 8
          %s147 = scalar_lea.vmem %s1, %s146
          %s148 = smul.u32 2, %s22
        $region16: #{simple_segmentation_forward.7} parent=11 // pred_fallthru
          _
        // Predicated region
        $region17: #{simple_segmentation_forward.7} parent=11 // pred_check
          %p149 = pneg %p97
        $region18: #{simple_segmentation_forward.7} parent=11 // pred_check_branch
          %151 = sbr.rel (%p149) target = $region20
        $region19: #{simple_segmentation_forward.7} parent=11 // pred_region
          _
        $region20: #{simple_segmentation_forward.7} parent=11 // pred_fallthru
          _
      $region12: #{simple_segmentation_forward.7} parent=5 // pred_fallthru
        _
      %p152 = scmp.lt.s32.totalorder %s12, 10
      // Predicated region
      $region21: #{simple_segmentation_forward.7} parent=5 // pred_check
        %p153 = pneg %p152
      $region22: #{simple_segmentation_forward.7} parent=5 // pred_check_branch
        %155 = sbr.rel (%p153) target = $region24
      $region23: #{simple_segmentation_forward.7} parent=5 // pred_region
        // Predicated region
        $region25: #{simple_segmentation_forward.7} parent=23 // pred_check
          %p156 = pneg %p44
        $region26: #{simple_segmentation_forward.7} parent=23 // pred_check_branch
          %158 = sbr.rel (%p156) target = $region28
        $region27: #{simple_segmentation_forward.7} parent=23 // pred_region
          %p159 = scmp.lt.s32.totalorder %s19, 9
          %s160 = scalar_select %p159, %s19, 9
          %s161 = smul.addr %s160, 4
          %s162 = scalar_lea.vmem %s0, %s161
        $region28: #{simple_segmentation_forward.7} parent=23 // pred_fallthru
          _
      $region24: #{simple_segmentation_forward.7} parent=5 // pred_fallthru
        _
      %p163 = scmp.le.s32.totalorder 1, %s12
      %p164 = scmp.lt.s32.totalorder %s12, 11
      %p165 = pnand %p163, %p164
      %p166 = pneg %p165
      // Predicated region
      $region29: #{simple_segmentation_forward.7} parent=5 // pred_check
        _
      $region30: #{simple_segmentation_forward.7} parent=5 // pred_check_branch
        %168 = sbr.rel (%p165) target = $region32
      $region31: #{simple_segmentation_forward.7} parent=5 // pred_region
        %s169 = ssub.s32 %s12, 1
        %p170 = scmp.lt.s32.totalorder %s21, 9
        %s171 = scalar_select %p170, %s21, 9
        %s172 = smul.addr %s171, 4
        %s173 = scalar_lea.vmem %s0, %s172
        %p174 = pneg %p50
        %p175 = pneg %p47
        %s176 = smul.u32 2, %s22
        %p177 = scmp.lt.s32.totalorder %s176, 1
        %s178 = scalar_select %p177, %s176, 1
        %s179 = smul.addr %s178, 8
        %s180 = scalar_lea.vmem %s1, %s179
        %p181 = pneg %p76
        %p182 = pneg %p73
        %p183 = pneg %p97
        %p184 = pneg %p94
        %p185 = pneg %p125
        %p186 = pneg %p122
        %s187 = sand.u32 %s112, 1
        %s188 = scalar_lea.sflag [#allocation3], %s187
        %s189 = sand.u32 %s112, 1
        %s190 = smul.addr %s189, 16
        %s191 = scalar_lea.vmem [#allocation2], %s190
        %p192 = scmp.lt.s32.totalorder %s21, 9
        %s193 = scalar_select %p192, %s21, 9
        %s194 = smul.addr %s193, 4
        %s195 = scalar_lea.vmem %s0, %s194
        %s196 = smul.u32 2, %s22
        %p197 = scmp.lt.s32.totalorder %s196, 1
        %s198 = scalar_select %p197, %s196, 1
        %s199 = smul.addr %s198, 8
        %s200 = scalar_lea.vmem %s1, %s199
        %s201 = smul.u32 2, %s22
        %s202 = smul.u32 2, %s22
        %v203 = vld [vmem:[%s195] sm:$0xf]
        %v204 = vld [vmem:[%s200] sm:$0xff]
        %v205 = vld [vmem:[%s200 + $0x8] sm:$0xff]
        %vm206 = vcmask 31744
        %v208 = vsel %vm206, %v204, 0
        %v211 = vsel %vm206, %v205, 0
        %vm213 = vcmask 1043456
        %v215 = vsel %vm213, %v203, 0
        %217 = vmatprep.subr.mxu0 0.0
        %218 = vmatpush1.msra.mxu0 0.0
        %219 = vmatprep.subr.mxu0 0.0
        %220 = vmatpush1.msra.mxu0 0.0
        %221 = vmatprep.subr.mxu0 0.0
        %222 = vmatpush1.msra.mxu0 0.0
        %223 = vmatprep.subr.mxu0 0.0
        %224 = vmatpush1.msra.mxu0 0.0
        %225 = vmatprep.subr.mxu0 0.0
        %226 = vmatpush1.msra.mxu0 0.0
        %227 = vmatprep.subr.mxu0 0.0
        %228 = vmatpush1.msra.mxu0 0.0
        %229 = vmatprep.subr.mxu0 0.0
        %230 = vmatpush1.msra.mxu0 0.0
        %231 = vmatprep.subr.mxu0 0.0
        %232 = vmatpush1.msra.mxu0 0.0
        %233 = vmatprep.subr.mxu0 0.0
        %234 = vmatpush1.msra.mxu0 0.0
        %235 = vmatprep.subr.mxu0 0.0
        %236 = vmatpush1.msra.mxu0 0.0
        %237 = vmatprep.subr.mxu0 0.0
        %238 = vmatpush1.msra.mxu0 0.0
        %239 = vmatprep.subr.mxu0 0.0
        %240 = vmatpush1.msra.mxu0 0.0
        %241 = vmatprep.subr.mxu0 0.0
        %242 = vmatpush1.msra.mxu0 0.0
        %243 = vmatprep.subr.mxu0 0.0
        %244 = vmatpush1.msra.mxu0 0.0
        %245 = vmatprep.subr.mxu0 0.0
        %246 = vmatpush1.msra.mxu0 0.0
        %247 = vmatprep.subr.mxu0 0.0
        %248 = vmatpush1.msra.mxu0 %v215
        %249 = vmatprep.subr.mxu0 0.0
        %250 = vmatpush2.msra.mxu0 0.0
        %251 = vmatprep.subr.mxu0 0.0
        %252 = vmatpush2.msra.mxu0 0.0
        %253 = vmatprep.subr.mxu0 0.0
        %254 = vmatpush2.msra.mxu0 0.0
        %255 = vmatprep.subr.mxu0 0.0
        %256 = vmatpush2.msra.mxu0 0.0
        %257 = vmatprep.subr.mxu0 0.0
        %258 = vmatpush2.msra.mxu0 0.0
        %259 = vmatprep.subr.mxu0 0.0
        %260 = vmatpush2.msra.mxu0 0.0
        %261 = vmatprep.subr.mxu0 0.0
        %262 = vmatpush2.msra.mxu0 0.0
        %263 = vmatprep.subr.mxu0 0.0
        %264 = vmatpush2.msra.mxu0 0.0
        %265 = vmatprep.subr.mxu0 0.0
        %266 = vmatpush2.msra.mxu0 0.0
        %267 = vmatprep.subr.mxu0 0.0
        %268 = vmatpush2.msra.mxu0 0.0
        %269 = vmatprep.subr.mxu0 0.0
        %270 = vmatpush2.msra.mxu0 0.0
        %271 = vmatprep.subr.mxu0 0.0
        %272 = vmatpush2.msra.mxu0 0.0
        %273 = vmatprep.subr.mxu0 0.0
        %274 = vmatpush2.msra.mxu0 0.0
        %275 = vmatprep.subr.mxu0 0.0
        %276 = vmatpush2.msra.mxu0 0.0
        %277 = vmatprep.subr.mxu0 0.0
        %278 = vmatpush2.msra.mxu0 0.0
        %279 = vmatprep.subr.mxu0 0.0
        %280 = vmatpush2.msra.mxu0 0.0
        %281 = vmatprep.mubr.f32.mxu0 0.0
        %282 = vmatmul.mubr.f32.gmra.mxu0 %v208
        %v283 = vpop.f32.mrf.mxu0
        %v284 = vadd.f32 0.0, %v283
        %v285 = vpop.f32.mrf.mxu0
        %286 = vmatprep.mubr.f32.mxu0 0.0
        %287 = vmatmul.mubr.f32.gmra.mxu0 %v211
        %v288 = vpop.f32.mrf.mxu0
        %v289 = vadd.f32 0.0, %v288
        %v290 = vpop.f32.mrf.mxu0
        %291 = vdwg.mxu0
        %v292 = vld [vmem:[%s2] sm:$0xf]
        %v294 = vsel %vm206, %v284, 0
        %v297 = vsel %vm206, %v289, 0
        %v300 = vsel %vm213, %v292, 0
        %302 = vmatprep.subr.mxu0 0.0
        %303 = vmatpush1.msra.mxu0 0.0
        %304 = vmatprep.subr.mxu0 0.0
        %305 = vmatpush1.msra.mxu0 0.0
        %306 = vmatprep.subr.mxu0 0.0
        %307 = vmatpush1.msra.mxu0 0.0
        %308 = vmatprep.subr.mxu0 0.0
        %309 = vmatpush1.msra.mxu0 0.0
        %310 = vmatprep.subr.mxu0 0.0
        %311 = vmatpush1.msra.mxu0 0.0
        %312 = vmatprep.subr.mxu0 0.0
        %313 = vmatpush1.msra.mxu0 0.0
        %314 = vmatprep.subr.mxu0 0.0
        %315 = vmatpush1.msra.mxu0 0.0
        %316 = vmatprep.subr.mxu0 0.0
        %317 = vmatpush1.msra.mxu0 0.0
        %318 = vmatprep.subr.mxu0 0.0
        %319 = vmatpush1.msra.mxu0 0.0
        %320 = vmatprep.subr.mxu0 0.0
        %321 = vmatpush1.msra.mxu0 0.0
        %322 = vmatprep.subr.mxu0 0.0
        %323 = vmatpush1.msra.mxu0 0.0
        %324 = vmatprep.subr.mxu0 0.0
        %325 = vmatpush1.msra.mxu0 0.0
        %326 = vmatprep.subr.mxu0 0.0
        %327 = vmatpush1.msra.mxu0 0.0
        %328 = vmatprep.subr.mxu0 0.0
        %329 = vmatpush1.msra.mxu0 0.0
        %330 = vmatprep.subr.mxu0 0.0
        %331 = vmatpush1.msra.mxu0 0.0
        %332 = vmatprep.subr.mxu0 0.0
        %333 = vmatpush1.msra.mxu0 %v300
        %334 = vmatprep.subr.mxu0 0.0
        %335 = vmatpush2.msra.mxu0 0.0
        %336 = vmatprep.subr.mxu0 0.0
        %337 = vmatpush2.msra.mxu0 0.0
        %338 = vmatprep.subr.mxu0 0.0
        %339 = vmatpush2.msra.mxu0 0.0
        %340 = vmatprep.subr.mxu0 0.0
        %341 = vmatpush2.msra.mxu0 0.0
        %342 = vmatprep.subr.mxu0 0.0
        %343 = vmatpush2.msra.mxu0 0.0
        %344 = vmatprep.subr.mxu0 0.0
        %345 = vmatpush2.msra.mxu0 0.0
        %346 = vmatprep.subr.mxu0 0.0
        %347 = vmatpush2.msra.mxu0 0.0
        %348 = vmatprep.subr.mxu0 0.0
        %349 = vmatpush2.msra.mxu0 0.0
        %350 = vmatprep.subr.mxu0 0.0
        %351 = vmatpush2.msra.mxu0 0.0
        %352 = vmatprep.subr.mxu0 0.0
        %353 = vmatpush2.msra.mxu0 0.0
        %354 = vmatprep.subr.mxu0 0.0
        %355 = vmatpush2.msra.mxu0 0.0
        %356 = vmatprep.subr.mxu0 0.0
        %357 = vmatpush2.msra.mxu0 0.0
        %358 = vmatprep.subr.mxu0 0.0
        %359 = vmatpush2.msra.mxu0 0.0
        %360 = vmatprep.subr.mxu0 0.0
        %361 = vmatpush2.msra.mxu0 0.0
        %362 = vmatprep.subr.mxu0 0.0
        %363 = vmatpush2.msra.mxu0 0.0
        %364 = vmatprep.subr.mxu0 0.0
        %365 = vmatpush2.msra.mxu0 0.0
        %366 = vmatprep.mubr.f32.mxu0 0.0
        %367 = vmatmul.mubr.f32.gmra.mxu0 %v294
        %v368 = vpop.f32.mrf.mxu0
        %v369 = vadd.f32 0.0, %v368
        %v370 = vpop.f32.mrf.mxu0
        %371 = vmatprep.mubr.f32.mxu0 0.0
        %372 = vmatmul.mubr.f32.gmra.mxu0 %v297
        %v373 = vpop.f32.mrf.mxu0
        %v374 = vadd.f32 0.0, %v373
        %v375 = vpop.f32.mrf.mxu0
        %376 = vdwg.mxu0
        %vm377 = vcmask 130048
        %378 = vst.msk [vmem:[%s191] sm:$0xff] %vm377, %v369
        %379 = vst.msk [vmem:[%s191 + $0x8] sm:$0xff] %vm377, %v374
        %s380 = sand.u32 %s112, 1
        %s381 = scalar_lea.sflag [#allocation3], %s380
        %s382 = sand.u32 %s112, 1
        %s383 = smul.addr %s382, 16
        %s384 = scalar_lea.vmem [#allocation2], %s383
        // Predicated region
        $region33: #{simple_segmentation_forward.7} parent=31 // pred_check
          %p385 = pneg %p122
        $region34: #{simple_segmentation_forward.7} parent=31 // pred_check_branch
          %387 = sbr.rel (%p385) target = $region36
        $region35: #{simple_segmentation_forward.7} parent=31 // pred_region
          %s388 = smul.u32 2, %s22
          %s390 = ssub.s32 256, 256
          %391 = vsyncadd %s381, %s390
          %s392 = smul.addr %s21, 2
          %s393 = sadd.s32 %s388, %s392
          %s394 = smul.addr %s393, 128
          %s395 = scalar_lea.hbm %s3, %s394
          %s396 = sshll.u32 %s384, 4
          %s397 = int_to_ptr.vmem [resolvable:$true] %s396
          %402 = dma.vmem_to_hbm [thread:$0]  %s397, 256, %s395, %s381, 128, 128, 8
        $region36: #{simple_segmentation_forward.7} parent=31 // pred_fallthru
          _
      $region32: #{simple_segmentation_forward.7} parent=5 // pred_fallthru
        _
      %p403 = scmp.le.s32.totalorder 2, %s12
      // Predicated region
      $region37: #{simple_segmentation_forward.7} parent=5 // pred_check
        %p404 = pneg %p403
      $region38: #{simple_segmentation_forward.7} parent=5 // pred_check_branch
        %406 = sbr.rel (%p404) target = $region40
      $region39: #{simple_segmentation_forward.7} parent=5 // pred_region
        %s407 = ssub.s32 %s12, 2
        // Predicated region
        $region41: #{simple_segmentation_forward.7} parent=39 // pred_check
          %p408 = pneg %p128
        $region42: #{simple_segmentation_forward.7} parent=39 // pred_check_branch
          %410 = sbr.rel (%p408) target = $region44
        $region43: #{simple_segmentation_forward.7} parent=39 // pred_region
          %s411 = sand.u32 %s113, 1
          %s412 = scalar_lea.sflag [#allocation3], %s411
          %s413 = sand.u32 %s113, 1
          %s414 = smul.addr %s413, 16
          %s415 = scalar_lea.vmem [#allocation2], %s414
          %416 = dma.done %s412, 256
        $region44: #{simple_segmentation_forward.7} parent=39 // pred_fallthru
          _
      $region40: #{simple_segmentation_forward.7} parent=5 // pred_fallthru
        _
    $region6: #{simple_segmentation_forward.7} parent=1 // loop_footer
      %s16 = sadd.s32 1, %s12
    $region7: #{simple_segmentation_forward.7} parent=1 // loop_footer_branch
      %11 = sbr.rel target = $region3
    $region8: #{simple_segmentation_forward.7} parent=1 // loop_exit
      _
    %417 = vsyncpa [#allocation3], 1
    %s418 = scalar_lea.sflag [#allocation3], 1
    %419 = vsyncpa %s418, 1

</llo_original>
